<compile_context>
chip_gen: v6e
topology: v6e:2x2x1
jax: 0.10.0
libtpu: 0.0.40
codegen_flags: <defaults>
</compile_context>

<pallas_src>
import math

import jax
import jax.numpy as jnp
from jax.experimental import pallas as pl
from jax.experimental.pallas import tpu as pltpu

LANE = 128


def _round_up(v, m):
    return (v + m - 1) // m * m


# ------------------------------- fused kernel --------------------------------

def gcn_fused_kernel(x_ref, adj_ref, w1_ref, wg_ref, b1wg_ref, bg_ref, out_ref):
    """out = adj @ ((adj @ (x @ W1)) @ Wg + b1@Wg) + bg, all in one invocation."""
    adj_bf = adj_ref[...].astype(jnp.bfloat16)   # cast once, reused for both layers
    x_bf = x_ref[...].astype(jnp.bfloat16)

    # gc1 support: [N, nhid_p], f32 accumulation on the MXU.
    s1 = jnp.dot(x_bf, w1_ref[...], preferred_element_type=jnp.float32)

    # Aggregate and project straight to class width; b1 is pre-folded through
    # Wg (b1wg = b1 @ Wg) so the gc1 bias contribution stays in f32.
    x1 = jnp.dot(adj_bf, s1.astype(jnp.bfloat16),
                 preferred_element_type=jnp.float32)
    s2 = jnp.dot(x1.astype(jnp.bfloat16), wg_ref[...],
                 preferred_element_type=jnp.float32) + b1wg_ref[...]

    # Final aggregation + gc bias; lane-dense [N, 128] f32 store.
    out = jnp.dot(adj_bf, s2.astype(jnp.bfloat16),
                  preferred_element_type=jnp.float32) + bg_ref[...]
    out_ref[...] = out.astype(out_ref.dtype)


# --------------------------------- wrapper -----------------------------------

def _vmem_bytes_estimate(n, f_in, nhid_p, nclass_p):
    # Inputs + output (pipeline may double-buffer) + in-kernel temporaries.
    io = 2 * (n * f_in * 4 + n * n * 4 + f_in * nhid_p * 2
              + nhid_p * nclass_p * 2 + 2 * nclass_p * 4 + n * nclass_p * 4)
    tmp = n * n * 2 + n * f_in * 2 + n * nhid_p * 6 + n * nclass_p * 6
    return io + tmp


@jax.jit
def gcn_forward(x, adj, w1, b1, wg, bg):
    """GCN forward (eval mode): adj @ ((adj @ (x @ W1) + b1) @ Wg) + bg."""
    n, f_in = x.shape
    nhid = w1.shape[1]
    nclass = wg.shape[1]
    assert adj.shape == (n, n)
    assert n % 8 == 0 and f_in % LANE == 0

    nhid_p = _round_up(max(nhid, LANE), LANE)
    nclass_p = _round_up(max(nclass, LANE), LANE)

    # Residency cap for the fully-fused variant (see TODO above for large N).
    assert _vmem_bytes_estimate(n, f_in, nhid_p, nclass_p) < 24 * 1024 * 1024, (
        "problem no longer fits VMEM-resident fused kernel; use a streamed variant")

    # Zero-padding the extra hidden / class lanes keeps the math exact.
    w1p = (jnp.zeros((f_in, nhid_p), jnp.float32)
           .at[:, :nhid].set(w1).astype(jnp.bfloat16))
    wgp = (jnp.zeros((nhid_p, nclass_p), jnp.float32)
           .at[:nhid, :nclass].set(wg).astype(jnp.bfloat16))
    # b1 folded through Wg (f32); gc bias padded to the lane width.
    b1wg = (jnp.zeros((1, nclass_p), jnp.float32)
            .at[:, :nclass].set(jnp.dot(b1.reshape(1, -1), wg)))
    bgp = jnp.zeros((1, nclass_p), jnp.float32).at[:, :nclass].set(bg)

    flops = 2 * n * (f_in * nhid_p + n * nhid_p + nhid_p * nclass_p + n * nclass_p)
    bytes_accessed = (n * f_in * 4 + n * n * 4 + f_in * nhid_p * 2
                      + nhid_p * nclass_p * 2 + 2 * nclass_p * 4 + n * nclass_p * 4)

    out_pad = pl.pallas_call(
        gcn_fused_kernel,
        out_shape=jax.ShapeDtypeStruct((n, nclass_p), jnp.float32),
        grid=(1,),
        in_specs=[
            pl.BlockSpec((n, f_in), lambda i: (0, 0)),          # x       (f32)
            pl.BlockSpec((n, n), lambda i: (0, 0)),             # adj     (f32)
            pl.BlockSpec((f_in, nhid_p), lambda i: (0, 0)),     # W1      (bf16)
            pl.BlockSpec((nhid_p, nclass_p), lambda i: (0, 0)), # Wg      (bf16)
            pl.BlockSpec((1, nclass_p), lambda i: (0, 0)),      # b1 @ Wg (f32)
            pl.BlockSpec((1, nclass_p), lambda i: (0, 0)),      # bg      (f32)
        ],
        out_specs=pl.BlockSpec((n, nclass_p), lambda i: (0, 0)),
        compiler_params=pltpu.CompilerParams(vmem_limit_bytes=32 * 1024 * 1024),
        cost_estimate=pl.CostEstimate(flops=flops, transcendentals=0,
                                      bytes_accessed=bytes_accessed),
    )(x, adj, w1p, wgp, b1wg, bgp)

    return out_pad[:, :nclass]


# -------------------------------- references ---------------------------------

def gcn_reference_bf16(x, adj, w1, b1, wg, bg):
    """Plain-JAX reference, PyTorch op order, bf16 operands / f32 accumulation."""
    bf = jnp.bfloat16
    s1 = jnp.dot(x.astype(bf), w1.astype(bf), preferred_element_type=jnp.float32)
    x1 = jnp.dot(adj.astype(bf), s1.astype(bf), preferred_element_type=jnp.float32) + b1
    s2 = jnp.dot(x1.astype(bf), wg.astype(bf), preferred_element_type=jnp.float32)
    return jnp.dot(adj.astype(bf), s2.astype(bf), preferred_element_type=jnp.float32) + bg


def gcn_reference_f32(x, adj, w1, b1, wg, bg):
    """Plain-JAX f32 reference matching the PyTorch module's op order."""
    x1 = jnp.dot(adj, jnp.dot(x, w1)) + b1
    return jnp.dot(adj, jnp.dot(x1, wg)) + bg


def init_graph_conv_params(key, in_features, out_features):
    """Matches GraphConvolution.reset_parameters: U(-stdv, stdv), stdv=1/sqrt(out)."""
    stdv = 1.0 / math.sqrt(out_features)
    kw, kb = jax.random.split(key)
    w = jax.random.uniform(kw, (in_features, out_features), jnp.float32, -stdv, stdv)
    b = jax.random.uniform(kb, (out_features,), jnp.float32, -stdv, stdv)
    return w, b


if __name__ == "__main__":
    key = jax.random.PRNGKey(0)
    k_x, k_adj, k_gc1, k_gc = jax.random.split(key, 4)

    # Shapes consistent with the module: 768-dim input features, nhid=32, nclass=2.
    # N=256 nodes keeps the MXU M dimension filled while staying VMEM-resident.
    N, F_IN, NHID, NCLASS = 256, 768, 32, 2

    x = jax.random.normal(k_x, (N, F_IN), jnp.float32)

    # Symmetric row-normalized adjacency with self-loops (typical GCN input).
    a = (jax.random.uniform(k_adj, (N, N)) < 0.05).astype(jnp.float32)
    a = jnp.maximum(a, a.T) + jnp.eye(N, dtype=jnp.float32)
    adj = a / jnp.sum(a, axis=1, keepdims=True)

    # Parameters (gc1: 768 -> nhid, gc: nhid -> nclass). gc2 / mlp / gate are
    # unused in GCN.forward and are not materialized here.
    w1, b1 = init_graph_conv_params(k_gc1, F_IN, NHID)
    wg, bg = init_graph_conv_params(k_gc, NHID, NCLASS)

    out = jax.block_until_ready(gcn_forward(x, adj, w1, b1, wg, bg))
    assert out.shape == (N, NCLASS)
    assert out.dtype == jnp.float32

    # Tight check vs. a reference using the same bf16-operand / f32-accum recipe.
    ref_bf = gcn_reference_bf16(x, adj, w1, b1, wg, bg)
    err_bf = float(jnp.max(jnp.abs(out - ref_bf)))
    assert jnp.allclose(out, ref_bf, atol=3e-2, rtol=3e-2), err_bf

    # Looser check vs. the full-f32 PyTorch-order reference (bf16 operand budget).
    ref_f32 = gcn_reference_f32(x, adj, w1, b1, wg, bg)
    err_f32 = float(jnp.max(jnp.abs(out - ref_f32)))
    assert jnp.allclose(out, ref_f32, atol=1e-1, rtol=1e-1), err_f32

    print("KERNEL_OK")
</pallas_src>

<mosaic_0001>
module attributes {stable_mosaic.version = 11 : i64} {
  func.func @gcn_fused_kernel(%arg0: i32, %arg1: memref<256x768xf32, #tpu.memory_space<vmem>>, %arg2: memref<256x256xf32, #tpu.memory_space<vmem>>, %arg3: memref<768x128xbf16, #tpu.memory_space<vmem>>, %arg4: memref<128x128xbf16, #tpu.memory_space<vmem>>, %arg5: memref<1x128xf32, #tpu.memory_space<vmem>>, %arg6: memref<1x128xf32, #tpu.memory_space<vmem>>, %arg7: memref<256x128xf32, #tpu.memory_space<vmem>>) attributes {dimension_semantics = [#tpu.dimension_semantics<arbitrary>], iteration_bounds = array<i64: 1>, scalar_prefetch = 0 : i64, scratch_operands = 0 : i64, tpu.core_type = #tpu.core_type<tc>, window_params = [{pipeline_mode = #tpu.pipeline_mode<synchronous>, transform_indices = @transform_0, window_bounds = array<i64: 256, 768>}, {pipeline_mode = #tpu.pipeline_mode<synchronous>, transform_indices = @transform_1, window_bounds = array<i64: 256, 256>}, {pipeline_mode = #tpu.pipeline_mode<synchronous>, transform_indices = @transform_2, window_bounds = array<i64: 768, 128>}, {pipeline_mode = #tpu.pipeline_mode<synchronous>, transform_indices = @transform_3, window_bounds = array<i64: 128, 128>}, {pipeline_mode = #tpu.pipeline_mode<synchronous>, transform_indices = @transform_4, window_bounds = array<i64: 1, 128>}, {pipeline_mode = #tpu.pipeline_mode<synchronous>, transform_indices = @transform_5, window_bounds = array<i64: 1, 128>}, {pipeline_mode = #tpu.pipeline_mode<synchronous>, transform_indices = @transform_6, window_bounds = array<i64: 256, 128>}]} {
    %c0 = arith.constant 0 : index
    %c0_0 = arith.constant 0 : index
    %0 = vector.load %arg2[%c0, %c0_0] : memref<256x256xf32, #tpu.memory_space<vmem>>, vector<256x256xf32>
    %1 = arith.truncf %0 : vector<256x256xf32> to vector<256x256xbf16>
    %c0_1 = arith.constant 0 : index
    %c0_2 = arith.constant 0 : index
    %2 = vector.load %arg1[%c0_1, %c0_2] : memref<256x768xf32, #tpu.memory_space<vmem>>, vector<256x768xf32>
    %3 = arith.truncf %2 : vector<256x768xf32> to vector<256x768xbf16>
    %c0_3 = arith.constant 0 : index
    %c0_4 = arith.constant 0 : index
    %4 = vector.load %arg3[%c0_3, %c0_4] : memref<768x128xbf16, #tpu.memory_space<vmem>>, vector<768x128xbf16>
    %cst = arith.constant dense<0.000000e+00> : vector<256x128xf32>
    %5 = tpu.matmul %3, %4, %cst {dimension_numbers = #tpu.dot_dimension_numbers<[1], [0], [0], [1], [0, 0, 1, 1], [], []>} : vector<256x768xbf16>, vector<768x128xbf16>, vector<256x128xf32> -> vector<256x128xf32>
    %6 = arith.truncf %5 : vector<256x128xf32> to vector<256x128xbf16>
    %cst_5 = arith.constant dense<0.000000e+00> : vector<256x128xf32>
    %7 = tpu.matmul %1, %6, %cst_5 {dimension_numbers = #tpu.dot_dimension_numbers<[1], [0], [0], [1], [0, 0, 1, 1], [], []>} : vector<256x256xbf16>, vector<256x128xbf16>, vector<256x128xf32> -> vector<256x128xf32>
    %8 = arith.truncf %7 : vector<256x128xf32> to vector<256x128xbf16>
    %c0_6 = arith.constant 0 : index
    %c0_7 = arith.constant 0 : index
    %9 = vector.load %arg4[%c0_6, %c0_7] : memref<128x128xbf16, #tpu.memory_space<vmem>>, vector<128x128xbf16>
    %cst_8 = arith.constant dense<0.000000e+00> : vector<256x128xf32>
    %10 = tpu.matmul %8, %9, %cst_8 {dimension_numbers = #tpu.dot_dimension_numbers<[1], [0], [0], [1], [0, 0, 1, 1], [], []>} : vector<256x128xbf16>, vector<128x128xbf16>, vector<256x128xf32> -> vector<256x128xf32>
    %c0_9 = arith.constant 0 : index
    %c0_10 = arith.constant 0 : index
    %11 = vector.load %arg5[%c0_9, %c0_10] : memref<1x128xf32, #tpu.memory_space<vmem>>, vector<1x128xf32>
    %12 = vector.broadcast %11 : vector<1x128xf32> to vector<256x128xf32>
    %13 = arith.addf %10, %12 : vector<256x128xf32>
    %14 = arith.truncf %13 : vector<256x128xf32> to vector<256x128xbf16>
    %cst_11 = arith.constant dense<0.000000e+00> : vector<256x128xf32>
    %15 = tpu.matmul %1, %14, %cst_11 {dimension_numbers = #tpu.dot_dimension_numbers<[1], [0], [0], [1], [0, 0, 1, 1], [], []>} : vector<256x256xbf16>, vector<256x128xbf16>, vector<256x128xf32> -> vector<256x128xf32>
    %c0_12 = arith.constant 0 : index
    %c0_13 = arith.constant 0 : index
    %16 = vector.load %arg6[%c0_12, %c0_13] : memref<1x128xf32, #tpu.memory_space<vmem>>, vector<1x128xf32>
    %17 = vector.broadcast %16 : vector<1x128xf32> to vector<256x128xf32>
    %18 = arith.addf %15, %17 : vector<256x128xf32>
    %c0_14 = arith.constant 0 : index
    %c0_15 = arith.constant 0 : index
    %19 = vector.load %arg7[%c0_14, %c0_15] : memref<256x128xf32, #tpu.memory_space<vmem>>, vector<256x128xf32>
    tpu.vector_store %arg7[%c0_14, %c0_15], %18 {strides = array<i32>} : memref<256x128xf32, #tpu.memory_space<vmem>>, vector<256x128xf32>,
    return
  }
  func.func @transform_0(%arg0: i32) -> (i32, i32) {
    %c0_i32 = arith.constant 0 : i32
    %c0_i32_0 = arith.constant 0 : i32
    %c0_i32_1 = arith.constant 0 : i32
    return %c0_i32, %c0_i32_0 : i32, i32
  }
  func.func @transform_1(%arg0: i32) -> (i32, i32) {
    %c0_i32 = arith.constant 0 : i32
    %c0_i32_0 = arith.constant 0 : i32
    %c0_i32_1 = arith.constant 0 : i32
    return %c0_i32, %c0_i32_0 : i32, i32
  }
  func.func @transform_2(%arg0: i32) -> (i32, i32) {
    %c0_i32 = arith.constant 0 : i32
    %c0_i32_0 = arith.constant 0 : i32
    %c0_i32_1 = arith.constant 0 : i32
    return %c0_i32, %c0_i32_0 : i32, i32
  }
  func.func @transform_3(%arg0: i32) -> (i32, i32) {
    %c0_i32 = arith.constant 0 : i32
    %c0_i32_0 = arith.constant 0 : i32
    %c0_i32_1 = arith.constant 0 : i32
    return %c0_i32, %c0_i32_0 : i32, i32
  }
  func.func @transform_4(%arg0: i32) -> (i32, i32) {
    %c0_i32 = arith.constant 0 : i32
    %c0_i32_0 = arith.constant 0 : i32
    %c0_i32_1 = arith.constant 0 : i32
    return %c0_i32, %c0_i32_0 : i32, i32
  }
  func.func @transform_5(%arg0: i32) -> (i32, i32) {
    %c0_i32 = arith.constant 0 : i32
    %c0_i32_0 = arith.constant 0 : i32
    %c0_i32_1 = arith.constant 0 : i32
    return %c0_i32, %c0_i32_0 : i32, i32
  }
  func.func @transform_6(%arg0: i32) -> (i32, i32) {
    %c0_i32 = arith.constant 0 : i32
    %c0_i32_0 = arith.constant 0 : i32
    %c0_i32_1 = arith.constant 0 : i32
    return %c0_i32, %c0_i32_0 : i32, i32
  }
}

</mosaic_0001>

<llo_original>
// kernel: gcn_forward.1
$region0: #{gcn_forward.1}
  #allocation0 [shape = 'u32[]', space=smem, size = 0x4, offset = 0x4, fixed_abs, tag = 'smem constant byte address 0x4 - core index']
  #allocation1 [shape = 'u32[144,128]{1,0:T(1,128)}', space=vmem, size = 0x12000, scoped, tag = 'internal scratch']
  %s0 = inlined_call_operand.vmem [shape: f32[256,768], index: 0, kind: input, shape index: {}]
  %s1 = inlined_call_operand.vmem [shape: f32[256,256], index: 1, kind: input, shape index: {}]
  %s2 = inlined_call_operand.vmem [shape: bf16[768,128], index: 2, kind: input, shape index: {}]
  %s3 = inlined_call_operand.vmem [shape: bf16[128,128], index: 3, kind: input, shape index: {}]
  %s4 = inlined_call_operand.vmem [shape: f32[1,128], index: 4, kind: input, shape index: {}]
  %s5 = inlined_call_operand.vmem [shape: f32[1,128], index: 5, kind: input, shape index: {}]
  %s6 = inlined_call_operand.vmem [shape: f32[256,128], index: 6, kind: output, shape index: {}]
  %s7 = sld [smem:[#allocation0]]
  $region34: #{gcn_forward.1} parent=0
    _
  %s9 = ssub.s32 1, %s7
  %s10 = scalar_select 0, %s9, %s7
  // Predicated region
  $region2: #{gcn_forward.1} parent=0 // pred_check
    _
  $region3: #{gcn_forward.1} parent=0 // pred_check_branch
    %12 = sbr.rel (0) target = $region5
  $region4: #{gcn_forward.1} parent=0 // pred_region
    _
  $region5: #{gcn_forward.1} parent=0 // pred_fallthru
    _
  // Predicated region
  $region6: #{gcn_forward.1} parent=0 // pred_check
    _
  $region7: #{gcn_forward.1} parent=0 // pred_check_branch
    %14 = sbr.rel (0) target = $region9
  $region8: #{gcn_forward.1} parent=0 // pred_region
    _
  $region9: #{gcn_forward.1} parent=0 // pred_fallthru
    _
  // Predicated region
  $region10: #{gcn_forward.1} parent=0 // pred_check
    _
  $region11: #{gcn_forward.1} parent=0 // pred_check_branch
    %16 = sbr.rel (0) target = $region13
  $region12: #{gcn_forward.1} parent=0 // pred_region
    _
  $region13: #{gcn_forward.1} parent=0 // pred_fallthru
    _
  // Predicated region
  $region14: #{gcn_forward.1} parent=0 // pred_check
    _
  $region15: #{gcn_forward.1} parent=0 // pred_check_branch
    %18 = sbr.rel (0) target = $region17
  $region16: #{gcn_forward.1} parent=0 // pred_region
    _
  $region17: #{gcn_forward.1} parent=0 // pred_fallthru
    _
  // Predicated region
  $region18: #{gcn_forward.1} parent=0 // pred_check
    _
  $region19: #{gcn_forward.1} parent=0 // pred_check_branch
    %20 = sbr.rel (0) target = $region21
  $region20: #{gcn_forward.1} parent=0 // pred_region
    _
  $region21: #{gcn_forward.1} parent=0 // pred_fallthru
    _
  // Predicated region
  $region22: #{gcn_forward.1} parent=0 // pred_check
    _
  $region23: #{gcn_forward.1} parent=0 // pred_check_branch
    %22 = sbr.rel (0) target = $region25
  $region24: #{gcn_forward.1} parent=0 // pred_region
    _
  $region25: #{gcn_forward.1} parent=0 // pred_fallthru
    _
  %v24 = vld [vmem:[%s1] sm:$0xff]
  %v25 = vld [vmem:[%s1 + $0x8] sm:$0xff]
  %v26 = vld [vmem:[%s1 + $0x10] sm:$0xff]
  %v27 = vld [vmem:[%s1 + $0x18] sm:$0xff]
  %v28 = vld [vmem:[%s1 + $0x20] sm:$0xff]
  %v29 = vld [vmem:[%s1 + $0x28] sm:$0xff]
  %v30 = vld [vmem:[%s1 + $0x30] sm:$0xff]
  %v31 = vld [vmem:[%s1 + $0x38] sm:$0xff]
  %v32 = vld [vmem:[%s1 + $0x40] sm:$0xff]
  %v33 = vld [vmem:[%s1 + $0x48] sm:$0xff]
  %v34 = vld [vmem:[%s1 + $0x50] sm:$0xff]
  %v35 = vld [vmem:[%s1 + $0x58] sm:$0xff]
  %v36 = vld [vmem:[%s1 + $0x60] sm:$0xff]
  %v37 = vld [vmem:[%s1 + $0x68] sm:$0xff]
  %v38 = vld [vmem:[%s1 + $0x70] sm:$0xff]
  %v39 = vld [vmem:[%s1 + $0x78] sm:$0xff]
  %v40 = vld [vmem:[%s1 + $0x80] sm:$0xff]
  %v41 = vld [vmem:[%s1 + $0x88] sm:$0xff]
  %v42 = vld [vmem:[%s1 + $0x90] sm:$0xff]
  %v43 = vld [vmem:[%s1 + $0x98] sm:$0xff]
  %v44 = vld [vmem:[%s1 + $0xa0] sm:$0xff]
  %v45 = vld [vmem:[%s1 + $0xa8] sm:$0xff]
  %v46 = vld [vmem:[%s1 + $0xb0] sm:$0xff]
  %v47 = vld [vmem:[%s1 + $0xb8] sm:$0xff]
  %v48 = vld [vmem:[%s1 + $0xc0] sm:$0xff]
  %v49 = vld [vmem:[%s1 + $0xc8] sm:$0xff]
  %v50 = vld [vmem:[%s1 + $0xd0] sm:$0xff]
  %v51 = vld [vmem:[%s1 + $0xd8] sm:$0xff]
  %v52 = vld [vmem:[%s1 + $0xe0] sm:$0xff]
  %v53 = vld [vmem:[%s1 + $0xe8] sm:$0xff]
  %v54 = vld [vmem:[%s1 + $0xf0] sm:$0xff]
  %v55 = vld [vmem:[%s1 + $0xf8] sm:$0xff]
  %v56 = vld [vmem:[%s1 + $0x100] sm:$0xff]
  %v57 = vld [vmem:[%s1 + $0x108] sm:$0xff]
  %v58 = vld [vmem:[%s1 + $0x110] sm:$0xff]
  %v59 = vld [vmem:[%s1 + $0x118] sm:$0xff]
  %v60 = vld [vmem:[%s1 + $0x120] sm:$0xff]
  %v61 = vld [vmem:[%s1 + $0x128] sm:$0xff]
  %v62 = vld [vmem:[%s1 + $0x130] sm:$0xff]
  %v63 = vld [vmem:[%s1 + $0x138] sm:$0xff]
  %v64 = vld [vmem:[%s1 + $0x140] sm:$0xff]
  %v65 = vld [vmem:[%s1 + $0x148] sm:$0xff]
  %v66 = vld [vmem:[%s1 + $0x150] sm:$0xff]
  %v67 = vld [vmem:[%s1 + $0x158] sm:$0xff]
  %v68 = vld [vmem:[%s1 + $0x160] sm:$0xff]
  %v69 = vld [vmem:[%s1 + $0x168] sm:$0xff]
  %v70 = vld [vmem:[%s1 + $0x170] sm:$0xff]
  %v71 = vld [vmem:[%s1 + $0x178] sm:$0xff]
  %v72 = vld [vmem:[%s1 + $0x180] sm:$0xff]
  %v73 = vld [vmem:[%s1 + $0x188] sm:$0xff]
  %v74 = vld [vmem:[%s1 + $0x190] sm:$0xff]
  %v75 = vld [vmem:[%s1 + $0x198] sm:$0xff]
  %v76 = vld [vmem:[%s1 + $0x1a0] sm:$0xff]
  %v77 = vld [vmem:[%s1 + $0x1a8] sm:$0xff]
  %v78 = vld [vmem:[%s1 + $0x1b0] sm:$0xff]
  %v79 = vld [vmem:[%s1 + $0x1b8] sm:$0xff]
  %v80 = vld [vmem:[%s1 + $0x1c0] sm:$0xff]
  %v81 = vld [vmem:[%s1 + $0x1c8] sm:$0xff]
  %v82 = vld [vmem:[%s1 + $0x1d0] sm:$0xff]
  %v83 = vld [vmem:[%s1 + $0x1d8] sm:$0xff]
  %v84 = vld [vmem:[%s1 + $0x1e0] sm:$0xff]
  %v85 = vld [vmem:[%s1 + $0x1e8] sm:$0xff]
  %v86 = vld [vmem:[%s1 + $0x1f0] sm:$0xff]
  %v87 = vld [vmem:[%s1 + $0x1f8] sm:$0xff]
  %v88 = vpack.c.bf16 %v26, %v24
  %v89 = vpack.c.bf16 %v27, %v25
  %v90 = vpack.c.bf16 %v30, %v28
  %v91 = vpack.c.bf16 %v31, %v29
  %v92 = vpack.c.bf16 %v34, %v32
  %v93 = vpack.c.bf16 %v35, %v33
  %v94 = vpack.c.bf16 %v38, %v36
  %v95 = vpack.c.bf16 %v39, %v37
  %v96 = vpack.c.bf16 %v42, %v40
  %v97 = vpack.c.bf16 %v43, %v41
  %v98 = vpack.c.bf16 %v46, %v44
  %v99 = vpack.c.bf16 %v47, %v45
  %v100 = vpack.c.bf16 %v50, %v48
  %v101 = vpack.c.bf16 %v51, %v49
  %v102 = vpack.c.bf16 %v54, %v52
  %v103 = vpack.c.bf16 %v55, %v53
  %v104 = vpack.c.bf16 %v58, %v56
  %v105 = vpack.c.bf16 %v59, %v57
  %v106 = vpack.c.bf16 %v62, %v60
  %v107 = vpack.c.bf16 %v63, %v61
  %v108 = vpack.c.bf16 %v66, %v64
  %v109 = vpack.c.bf16 %v67, %v65
  %v110 = vpack.c.bf16 %v70, %v68
  %v111 = vpack.c.bf16 %v71, %v69
  %v112 = vpack.c.bf16 %v74, %v72
  %v113 = vpack.c.bf16 %v75, %v73
  %v114 = vpack.c.bf16 %v78, %v76
  %v115 = vpack.c.bf16 %v79, %v77
  %v116 = vpack.c.bf16 %v82, %v80
  %v117 = vpack.c.bf16 %v83, %v81
  %v118 = vpack.c.bf16 %v86, %v84
  %v119 = vpack.c.bf16 %v87, %v85
  %v120 = vld [vmem:[%s0] sm:$0xff]
  %v121 = vld [vmem:[%s0 + $0x8] sm:$0xff]
  %v122 = vld [vmem:[%s0 + $0x10] sm:$0xff]
  %v123 = vld [vmem:[%s0 + $0x18] sm:$0xff]
  %v124 = vld [vmem:[%s0 + $0x20] sm:$0xff]
  %v125 = vld [vmem:[%s0 + $0x28] sm:$0xff]
  %v126 = vld [vmem:[%s0 + $0x30] sm:$0xff]
  %v127 = vld [vmem:[%s0 + $0x38] sm:$0xff]
  %v128 = vld [vmem:[%s0 + $0x40] sm:$0xff]
  %v129 = vld [vmem:[%s0 + $0x48] sm:$0xff]
  %v130 = vld [vmem:[%s0 + $0x50] sm:$0xff]
  %v131 = vld [vmem:[%s0 + $0x58] sm:$0xff]
  %v132 = vld [vmem:[%s0 + $0x60] sm:$0xff]
  %v133 = vld [vmem:[%s0 + $0x68] sm:$0xff]
  %v134 = vld [vmem:[%s0 + $0x70] sm:$0xff]
  %v135 = vld [vmem:[%s0 + $0x78] sm:$0xff]
  %v136 = vld [vmem:[%s0 + $0x80] sm:$0xff]
  %v137 = vld [vmem:[%s0 + $0x88] sm:$0xff]
  %v138 = vld [vmem:[%s0 + $0x90] sm:$0xff]
  %v139 = vld [vmem:[%s0 + $0x98] sm:$0xff]
  %v140 = vld [vmem:[%s0 + $0xa0] sm:$0xff]
  %v141 = vld [vmem:[%s0 + $0xa8] sm:$0xff]
  %v142 = vld [vmem:[%s0 + $0xb0] sm:$0xff]
  %v143 = vld [vmem:[%s0 + $0xb8] sm:$0xff]
  %v144 = vld [vmem:[%s0 + $0xc0] sm:$0xff]
  %v145 = vld [vmem:[%s0 + $0xc8] sm:$0xff]
  %v146 = vld [vmem:[%s0 + $0xd0] sm:$0xff]
  %v147 = vld [vmem:[%s0 + $0xd8] sm:$0xff]
  %v148 = vld [vmem:[%s0 + $0xe0] sm:$0xff]
  %v149 = vld [vmem:[%s0 + $0xe8] sm:$0xff]
  %v150 = vld [vmem:[%s0 + $0xf0] sm:$0xff]
  %v151 = vld [vmem:[%s0 + $0xf8] sm:$0xff]
  %v152 = vld [vmem:[%s0 + $0x100] sm:$0xff]
  %v153 = vld [vmem:[%s0 + $0x108] sm:$0xff]
  %v154 = vld [vmem:[%s0 + $0x110] sm:$0xff]
  %v155 = vld [vmem:[%s0 + $0x118] sm:$0xff]
  %v156 = vld [vmem:[%s0 + $0x120] sm:$0xff]
  %v157 = vld [vmem:[%s0 + $0x128] sm:$0xff]
  %v158 = vld [vmem:[%s0 + $0x130] sm:$0xff]
  %v159 = vld [vmem:[%s0 + $0x138] sm:$0xff]
  %v160 = vld [vmem:[%s0 + $0x140] sm:$0xff]
  %v161 = vld [vmem:[%s0 + $0x148] sm:$0xff]
  %v162 = vld [vmem:[%s0 + $0x150] sm:$0xff]
  %v163 = vld [vmem:[%s0 + $0x158] sm:$0xff]
  %v164 = vld [vmem:[%s0 + $0x160] sm:$0xff]
  %v165 = vld [vmem:[%s0 + $0x168] sm:$0xff]
  %v166 = vld [vmem:[%s0 + $0x170] sm:$0xff]
  %v167 = vld [vmem:[%s0 + $0x178] sm:$0xff]
  %v168 = vld [vmem:[%s0 + $0x180] sm:$0xff]
  %v169 = vld [vmem:[%s0 + $0x188] sm:$0xff]
  %v170 = vld [vmem:[%s0 + $0x190] sm:$0xff]
  %v171 = vld [vmem:[%s0 + $0x198] sm:$0xff]
  %v172 = vld [vmem:[%s0 + $0x1a0] sm:$0xff]
  %v173 = vld [vmem:[%s0 + $0x1a8] sm:$0xff]
  %v174 = vld [vmem:[%s0 + $0x1b0] sm:$0xff]
  %v175 = vld [vmem:[%s0 + $0x1b8] sm:$0xff]
  %v176 = vld [vmem:[%s0 + $0x1c0] sm:$0xff]
  %v177 = vld [vmem:[%s0 + $0x1c8] sm:$0xff]
  %v178 = vld [vmem:[%s0 + $0x1d0] sm:$0xff]
  %v179 = vld [vmem:[%s0 + $0x1d8] sm:$0xff]
  %v180 = vld [vmem:[%s0 + $0x1e0] sm:$0xff]
  %v181 = vld [vmem:[%s0 + $0x1e8] sm:$0xff]
  %v182 = vld [vmem:[%s0 + $0x1f0] sm:$0xff]
  %v183 = vld [vmem:[%s0 + $0x1f8] sm:$0xff]
  %v184 = vld [vmem:[%s0 + $0x200] sm:$0xff]
  %v185 = vld [vmem:[%s0 + $0x208] sm:$0xff]
  %v186 = vld [vmem:[%s0 + $0x210] sm:$0xff]
  %v187 = vld [vmem:[%s0 + $0x218] sm:$0xff]
  %v188 = vld [vmem:[%s0 + $0x220] sm:$0xff]
  %v189 = vld [vmem:[%s0 + $0x228] sm:$0xff]
  %v190 = vld [vmem:[%s0 + $0x230] sm:$0xff]
  %v191 = vld [vmem:[%s0 + $0x238] sm:$0xff]
  %v192 = vld [vmem:[%s0 + $0x240] sm:$0xff]
  %v193 = vld [vmem:[%s0 + $0x248] sm:$0xff]
  %v194 = vld [vmem:[%s0 + $0x250] sm:$0xff]
  %v195 = vld [vmem:[%s0 + $0x258] sm:$0xff]
  %v196 = vld [vmem:[%s0 + $0x260] sm:$0xff]
  %v197 = vld [vmem:[%s0 + $0x268] sm:$0xff]
  %v198 = vld [vmem:[%s0 + $0x270] sm:$0xff]
  %v199 = vld [vmem:[%s0 + $0x278] sm:$0xff]
  %v200 = vld [vmem:[%s0 + $0x280] sm:$0xff]
  %v201 = vld [vmem:[%s0 + $0x288] sm:$0xff]
  %v202 = vld [vmem:[%s0 + $0x290] sm:$0xff]
  %v203 = vld [vmem:[%s0 + $0x298] sm:$0xff]
  %v204 = vld [vmem:[%s0 + $0x2a0] sm:$0xff]
  %v205 = vld [vmem:[%s0 + $0x2a8] sm:$0xff]
  %v206 = vld [vmem:[%s0 + $0x2b0] sm:$0xff]
  %v207 = vld [vmem:[%s0 + $0x2b8] sm:$0xff]
  %v208 = vld [vmem:[%s0 + $0x2c0] sm:$0xff]
  %v209 = vld [vmem:[%s0 + $0x2c8] sm:$0xff]
  %v210 = vld [vmem:[%s0 + $0x2d0] sm:$0xff]
  %v211 = vld [vmem:[%s0 + $0x2d8] sm:$0xff]
  %v212 = vld [vmem:[%s0 + $0x2e0] sm:$0xff]
  %v213 = vld [vmem:[%s0 + $0x2e8] sm:$0xff]
  %v214 = vld [vmem:[%s0 + $0x2f0] sm:$0xff]
  %v215 = vld [vmem:[%s0 + $0x2f8] sm:$0xff]
  %v216 = vld [vmem:[%s0 + $0x300] sm:$0xff]
  %v217 = vld [vmem:[%s0 + $0x308] sm:$0xff]
  %v218 = vld [vmem:[%s0 + $0x310] sm:$0xff]
  %v219 = vld [vmem:[%s0 + $0x318] sm:$0xff]
  %v220 = vld [vmem:[%s0 + $0x320] sm:$0xff]
  %v221 = vld [vmem:[%s0 + $0x328] sm:$0xff]
  %v222 = vld [vmem:[%s0 + $0x330] sm:$0xff]
  %v223 = vld [vmem:[%s0 + $0x338] sm:$0xff]
  %v224 = vld [vmem:[%s0 + $0x340] sm:$0xff]
  %v225 = vld [vmem:[%s0 + $0x348] sm:$0xff]
  %v226 = vld [vmem:[%s0 + $0x350] sm:$0xff]
  %v227 = vld [vmem:[%s0 + $0x358] sm:$0xff]
  %v228 = vld [vmem:[%s0 + $0x360] sm:$0xff]
  %v229 = vld [vmem:[%s0 + $0x368] sm:$0xff]
  %v230 = vld [vmem:[%s0 + $0x370] sm:$0xff]
  %v231 = vld [vmem:[%s0 + $0x378] sm:$0xff]
  %v232 = vld [vmem:[%s0 + $0x380] sm:$0xff]
  %v233 = vld [vmem:[%s0 + $0x388] sm:$0xff]
  %v234 = vld [vmem:[%s0 + $0x390] sm:$0xff]
  %v235 = vld [vmem:[%s0 + $0x398] sm:$0xff]
  %v236 = vld [vmem:[%s0 + $0x3a0] sm:$0xff]
  %v237 = vld [vmem:[%s0 + $0x3a8] sm:$0xff]
  %v238 = vld [vmem:[%s0 + $0x3b0] sm:$0xff]
  %v239 = vld [vmem:[%s0 + $0x3b8] sm:$0xff]
  %v240 = vld [vmem:[%s0 + $0x3c0] sm:$0xff]
  %v241 = vld [vmem:[%s0 + $0x3c8] sm:$0xff]
  %v242 = vld [vmem:[%s0 + $0x3d0] sm:$0xff]
  %v243 = vld [vmem:[%s0 + $0x3d8] sm:$0xff]
  %v244 = vld [vmem:[%s0 + $0x3e0] sm:$0xff]
  %v245 = vld [vmem:[%s0 + $0x3e8] sm:$0xff]
  %v246 = vld [vmem:[%s0 + $0x3f0] sm:$0xff]
  %v247 = vld [vmem:[%s0 + $0x3f8] sm:$0xff]
  %v248 = vld [vmem:[%s0 + $0x400] sm:$0xff]
  %v249 = vld [vmem:[%s0 + $0x408] sm:$0xff]
  %v250 = vld [vmem:[%s0 + $0x410] sm:$0xff]
  %v251 = vld [vmem:[%s0 + $0x418] sm:$0xff]
  %v252 = vld [vmem:[%s0 + $0x420] sm:$0xff]
  %v253 = vld [vmem:[%s0 + $0x428] sm:$0xff]
  %v254 = vld [vmem:[%s0 + $0x430] sm:$0xff]
  %v255 = vld [vmem:[%s0 + $0x438] sm:$0xff]
  %v256 = vld [vmem:[%s0 + $0x440] sm:$0xff]
  %v257 = vld [vmem:[%s0 + $0x448] sm:$0xff]
  %v258 = vld [vmem:[%s0 + $0x450] sm:$0xff]
  %v259 = vld [vmem:[%s0 + $0x458] sm:$0xff]
  %v260 = vld [vmem:[%s0 + $0x460] sm:$0xff]
  %v261 = vld [vmem:[%s0 + $0x468] sm:$0xff]
  %v262 = vld [vmem:[%s0 + $0x470] sm:$0xff]
  %v263 = vld [vmem:[%s0 + $0x478] sm:$0xff]
  %v264 = vld [vmem:[%s0 + $0x480] sm:$0xff]
  %v265 = vld [vmem:[%s0 + $0x488] sm:$0xff]
  %v266 = vld [vmem:[%s0 + $0x490] sm:$0xff]
  %v267 = vld [vmem:[%s0 + $0x498] sm:$0xff]
  %v268 = vld [vmem:[%s0 + $0x4a0] sm:$0xff]
  %v269 = vld [vmem:[%s0 + $0x4a8] sm:$0xff]
  %v270 = vld [vmem:[%s0 + $0x4b0] sm:$0xff]
  %v271 = vld [vmem:[%s0 + $0x4b8] sm:$0xff]
  %v272 = vld [vmem:[%s0 + $0x4c0] sm:$0xff]
  %v273 = vld [vmem:[%s0 + $0x4c8] sm:$0xff]
  %v274 = vld [vmem:[%s0 + $0x4d0] sm:$0xff]
  %v275 = vld [vmem:[%s0 + $0x4d8] sm:$0xff]
  %v276 = vld [vmem:[%s0 + $0x4e0] sm:$0xff]
  %v277 = vld [vmem:[%s0 + $0x4e8] sm:$0xff]
  %v278 = vld [vmem:[%s0 + $0x4f0] sm:$0xff]
  %v279 = vld [vmem:[%s0 + $0x4f8] sm:$0xff]
  %v280 = vld [vmem:[%s0 + $0x500] sm:$0xff]
  %v281 = vld [vmem:[%s0 + $0x508] sm:$0xff]
  %v282 = vld [vmem:[%s0 + $0x510] sm:$0xff]
  %v283 = vld [vmem:[%s0 + $0x518] sm:$0xff]
  %v284 = vld [vmem:[%s0 + $0x520] sm:$0xff]
  %v285 = vld [vmem:[%s0 + $0x528] sm:$0xff]
  %v286 = vld [vmem:[%s0 + $0x530] sm:$0xff]
  %v287 = vld [vmem:[%s0 + $0x538] sm:$0xff]
  %v288 = vld [vmem:[%s0 + $0x540] sm:$0xff]
  %v289 = vld [vmem:[%s0 + $0x548] sm:$0xff]
  %v290 = vld [vmem:[%s0 + $0x550] sm:$0xff]
  %v291 = vld [vmem:[%s0 + $0x558] sm:$0xff]
  %v292 = vld [vmem:[%s0 + $0x560] sm:$0xff]
  %v293 = vld [vmem:[%s0 + $0x568] sm:$0xff]
  %v294 = vld [vmem:[%s0 + $0x570] sm:$0xff]
  %v295 = vld [vmem:[%s0 + $0x578] sm:$0xff]
  %v296 = vld [vmem:[%s0 + $0x580] sm:$0xff]
  %v297 = vld [vmem:[%s0 + $0x588] sm:$0xff]
  %v298 = vld [vmem:[%s0 + $0x590] sm:$0xff]
  %v299 = vld [vmem:[%s0 + $0x598] sm:$0xff]
  %v300 = vld [vmem:[%s0 + $0x5a0] sm:$0xff]
  %v301 = vld [vmem:[%s0 + $0x5a8] sm:$0xff]
  %v302 = vld [vmem:[%s0 + $0x5b0] sm:$0xff]
  %v303 = vld [vmem:[%s0 + $0x5b8] sm:$0xff]
  %v304 = vld [vmem:[%s0 + $0x5c0] sm:$0xff]
  %v305 = vld [vmem:[%s0 + $0x5c8] sm:$0xff]
  %v306 = vld [vmem:[%s0 + $0x5d0] sm:$0xff]
  %v307 = vld [vmem:[%s0 + $0x5d8] sm:$0xff]
  %v308 = vld [vmem:[%s0 + $0x5e0] sm:$0xff]
  %v309 = vld [vmem:[%s0 + $0x5e8] sm:$0xff]
  %v310 = vld [vmem:[%s0 + $0x5f0] sm:$0xff]
  %v311 = vld [vmem:[%s0 + $0x5f8] sm:$0xff]
  %v312 = vpack.c.bf16 %v126, %v120
  %v313 = vpack.c.bf16 %v127, %v121
  %v314 = vpack.c.bf16 %v128, %v122
  %v315 = vpack.c.bf16 %v129, %v123
  %v316 = vpack.c.bf16 %v130, %v124
  %v317 = vpack.c.bf16 %v131, %v125
  %v318 = vpack.c.bf16 %v138, %v132
  %v319 = vpack.c.bf16 %v139, %v133
  %v320 = vpack.c.bf16 %v140, %v134
  %v321 = vpack.c.bf16 %v141, %v135
  %v322 = vpack.c.bf16 %v142, %v136
  %v323 = vpack.c.bf16 %v143, %v137
  %v324 = vpack.c.bf16 %v150, %v144
  %v325 = vpack.c.bf16 %v151, %v145
  %v326 = vpack.c.bf16 %v152, %v146
  %v327 = vpack.c.bf16 %v153, %v147
  %v328 = vpack.c.bf16 %v154, %v148
  %v329 = vpack.c.bf16 %v155, %v149
  %v330 = vpack.c.bf16 %v162, %v156
  %v331 = vpack.c.bf16 %v163, %v157
  %v332 = vpack.c.bf16 %v164, %v158
  %v333 = vpack.c.bf16 %v165, %v159
  %v334 = vpack.c.bf16 %v166, %v160
  %v335 = vpack.c.bf16 %v167, %v161
  %v336 = vpack.c.bf16 %v174, %v168
  %v337 = vpack.c.bf16 %v175, %v169
  %v338 = vpack.c.bf16 %v176, %v170
  %v339 = vpack.c.bf16 %v177, %v171
  %v340 = vpack.c.bf16 %v178, %v172
  %v341 = vpack.c.bf16 %v179, %v173
  %v342 = vpack.c.bf16 %v186, %v180
  %v343 = vpack.c.bf16 %v187, %v181
  %v344 = vpack.c.bf16 %v188, %v182
  %v345 = vpack.c.bf16 %v189, %v183
  %v346 = vpack.c.bf16 %v190, %v184
  %v347 = vpack.c.bf16 %v191, %v185
  %v348 = vpack.c.bf16 %v198, %v192
  %v349 = vpack.c.bf16 %v199, %v193
  %v350 = vpack.c.bf16 %v200, %v194
  %v351 = vpack.c.bf16 %v201, %v195
  %v352 = vpack.c.bf16 %v202, %v196
  %v353 = vpack.c.bf16 %v203, %v197
  %v354 = vpack.c.bf16 %v210, %v204
  %v355 = vpack.c.bf16 %v211, %v205
  %v356 = vpack.c.bf16 %v212, %v206
  %v357 = vpack.c.bf16 %v213, %v207
  %v358 = vpack.c.bf16 %v214, %v208
  %v359 = vpack.c.bf16 %v215, %v209
  %v360 = vpack.c.bf16 %v222, %v216
  %v361 = vpack.c.bf16 %v223, %v217
  %v362 = vpack.c.bf16 %v224, %v218
  %v363 = vpack.c.bf16 %v225, %v219
  %v364 = vpack.c.bf16 %v226, %v220
  %v365 = vpack.c.bf16 %v227, %v221
  %v366 = vpack.c.bf16 %v234, %v228
  %v367 = vpack.c.bf16 %v235, %v229
  %v368 = vpack.c.bf16 %v236, %v230
  %v369 = vpack.c.bf16 %v237, %v231
  %v370 = vpack.c.bf16 %v238, %v232
  %v371 = vpack.c.bf16 %v239, %v233
  %v372 = vpack.c.bf16 %v246, %v240
  %v373 = vpack.c.bf16 %v247, %v241
  %v374 = vpack.c.bf16 %v248, %v242
  %v375 = vpack.c.bf16 %v249, %v243
  %v376 = vpack.c.bf16 %v250, %v244
  %v377 = vpack.c.bf16 %v251, %v245
  %v378 = vpack.c.bf16 %v258, %v252
  %v379 = vpack.c.bf16 %v259, %v253
  %v380 = vpack.c.bf16 %v260, %v254
  %v381 = vpack.c.bf16 %v261, %v255
  %v382 = vpack.c.bf16 %v262, %v256
  %v383 = vpack.c.bf16 %v263, %v257
  %v384 = vpack.c.bf16 %v270, %v264
  %v385 = vpack.c.bf16 %v271, %v265
  %v386 = vpack.c.bf16 %v272, %v266
  %v387 = vpack.c.bf16 %v273, %v267
  %v388 = vpack.c.bf16 %v274, %v268
  %v389 = vpack.c.bf16 %v275, %v269
  %v390 = vpack.c.bf16 %v282, %v276
  %v391 = vpack.c.bf16 %v283, %v277
  %v392 = vpack.c.bf16 %v284, %v278
  %v393 = vpack.c.bf16 %v285, %v279
  %v394 = vpack.c.bf16 %v286, %v280
  %v395 = vpack.c.bf16 %v287, %v281
  %v396 = vpack.c.bf16 %v294, %v288
  %v397 = vpack.c.bf16 %v295, %v289
  %v398 = vpack.c.bf16 %v296, %v290
  %v399 = vpack.c.bf16 %v297, %v291
  %v400 = vpack.c.bf16 %v298, %v292
  %v401 = vpack.c.bf16 %v299, %v293
  %v402 = vpack.c.bf16 %v306, %v300
  %v403 = vpack.c.bf16 %v307, %v301
  %v404 = vpack.c.bf16 %v308, %v302
  %v405 = vpack.c.bf16 %v309, %v303
  %v406 = vpack.c.bf16 %v310, %v304
  %v407 = vpack.c.bf16 %v311, %v305
  %v408 = vld [vmem:[%s2] sm:$0xf]
  %v409 = vld [vmem:[%s2 + $0x4] sm:$0xf]
  %v410 = vld [vmem:[%s2 + $0x8] sm:$0xf]
  %v411 = vld [vmem:[%s2 + $0xc] sm:$0xf]
  %v412 = vld [vmem:[%s2 + $0x10] sm:$0xf]
  %v413 = vld [vmem:[%s2 + $0x14] sm:$0xf]
  %v414 = vld [vmem:[%s2 + $0x18] sm:$0xf]
  %v415 = vld [vmem:[%s2 + $0x1c] sm:$0xf]
  %v416 = vld [vmem:[%s2 + $0x20] sm:$0xf]
  %v417 = vld [vmem:[%s2 + $0x24] sm:$0xf]
  %v418 = vld [vmem:[%s2 + $0x28] sm:$0xf]
  %v419 = vld [vmem:[%s2 + $0x2c] sm:$0xf]
  %v420 = vld [vmem:[%s2 + $0x30] sm:$0xf]
  %v421 = vld [vmem:[%s2 + $0x34] sm:$0xf]
  %v422 = vld [vmem:[%s2 + $0x38] sm:$0xf]
  %v423 = vld [vmem:[%s2 + $0x3c] sm:$0xf]
  %v424 = vld [vmem:[%s2 + $0x40] sm:$0xf]
  %v425 = vld [vmem:[%s2 + $0x44] sm:$0xf]
  %v426 = vld [vmem:[%s2 + $0x48] sm:$0xf]
  %v427 = vld [vmem:[%s2 + $0x4c] sm:$0xf]
  %v428 = vld [vmem:[%s2 + $0x50] sm:$0xf]
  %v429 = vld [vmem:[%s2 + $0x54] sm:$0xf]
  %v430 = vld [vmem:[%s2 + $0x58] sm:$0xf]
  %v431 = vld [vmem:[%s2 + $0x5c] sm:$0xf]
  %v432 = vld [vmem:[%s2 + $0x60] sm:$0xf]
  %v433 = vld [vmem:[%s2 + $0x64] sm:$0xf]
  %v434 = vld [vmem:[%s2 + $0x68] sm:$0xf]
  %v435 = vld [vmem:[%s2 + $0x6c] sm:$0xf]
  %v436 = vld [vmem:[%s2 + $0x70] sm:$0xf]
  %v437 = vld [vmem:[%s2 + $0x74] sm:$0xf]
  %v438 = vld [vmem:[%s2 + $0x78] sm:$0xf]
  %v439 = vld [vmem:[%s2 + $0x7c] sm:$0xf]
  %v440 = vld [vmem:[%s2 + $0x80] sm:$0xf]
  %v441 = vld [vmem:[%s2 + $0x84] sm:$0xf]
  %v442 = vld [vmem:[%s2 + $0x88] sm:$0xf]
  %v443 = vld [vmem:[%s2 + $0x8c] sm:$0xf]
  %v444 = vld [vmem:[%s2 + $0x90] sm:$0xf]
  %v445 = vld [vmem:[%s2 + $0x94] sm:$0xf]
  %v446 = vld [vmem:[%s2 + $0x98] sm:$0xf]
  %v447 = vld [vmem:[%s2 + $0x9c] sm:$0xf]
  %v448 = vld [vmem:[%s2 + $0xa0] sm:$0xf]
  %v449 = vld [vmem:[%s2 + $0xa4] sm:$0xf]
  %v450 = vld [vmem:[%s2 + $0xa8] sm:$0xf]
  %v451 = vld [vmem:[%s2 + $0xac] sm:$0xf]
  %v452 = vld [vmem:[%s2 + $0xb0] sm:$0xf]
  %v453 = vld [vmem:[%s2 + $0xb4] sm:$0xf]
  %v454 = vld [vmem:[%s2 + $0xb8] sm:$0xf]
  %v455 = vld [vmem:[%s2 + $0xbc] sm:$0xf]
  %v456 = vld [vmem:[%s2 + $0xc0] sm:$0xf]
  %v457 = vld [vmem:[%s2 + $0xc4] sm:$0xf]
  %v458 = vld [vmem:[%s2 + $0xc8] sm:$0xf]
  %v459 = vld [vmem:[%s2 + $0xcc] sm:$0xf]
  %v460 = vld [vmem:[%s2 + $0xd0] sm:$0xf]
  %v461 = vld [vmem:[%s2 + $0xd4] sm:$0xf]
  %v462 = vld [vmem:[%s2 + $0xd8] sm:$0xf]
  %v463 = vld [vmem:[%s2 + $0xdc] sm:$0xf]
  %v464 = vld [vmem:[%s2 + $0xe0] sm:$0xf]
  %v465 = vld [vmem:[%s2 + $0xe4] sm:$0xf]
  %v466 = vld [vmem:[%s2 + $0xe8] sm:$0xf]
  %v467 = vld [vmem:[%s2 + $0xec] sm:$0xf]
  %v468 = vld [vmem:[%s2 + $0xf0] sm:$0xf]
  %v469 = vld [vmem:[%s2 + $0xf4] sm:$0xf]
  %v470 = vld [vmem:[%s2 + $0xf8] sm:$0xf]
  %v471 = vld [vmem:[%s2 + $0xfc] sm:$0xf]
  %v472 = vld [vmem:[%s2 + $0x100] sm:$0xf]
  %v473 = vld [vmem:[%s2 + $0x104] sm:$0xf]
  %v474 = vld [vmem:[%s2 + $0x108] sm:$0xf]
  %v475 = vld [vmem:[%s2 + $0x10c] sm:$0xf]
  %v476 = vld [vmem:[%s2 + $0x110] sm:$0xf]
  %v477 = vld [vmem:[%s2 + $0x114] sm:$0xf]
  %v478 = vld [vmem:[%s2 + $0x118] sm:$0xf]
  %v479 = vld [vmem:[%s2 + $0x11c] sm:$0xf]
  %v480 = vld [vmem:[%s2 + $0x120] sm:$0xf]
  %v481 = vld [vmem:[%s2 + $0x124] sm:$0xf]
  %v482 = vld [vmem:[%s2 + $0x128] sm:$0xf]
  %v483 = vld [vmem:[%s2 + $0x12c] sm:$0xf]
  %v484 = vld [vmem:[%s2 + $0x130] sm:$0xf]
  %v485 = vld [vmem:[%s2 + $0x134] sm:$0xf]
  %v486 = vld [vmem:[%s2 + $0x138] sm:$0xf]
  %v487 = vld [vmem:[%s2 + $0x13c] sm:$0xf]
  %v488 = vld [vmem:[%s2 + $0x140] sm:$0xf]
  %v489 = vld [vmem:[%s2 + $0x144] sm:$0xf]
  %v490 = vld [vmem:[%s2 + $0x148] sm:$0xf]
  %v491 = vld [vmem:[%s2 + $0x14c] sm:$0xf]
  %v492 = vld [vmem:[%s2 + $0x150] sm:$0xf]
  %v493 = vld [vmem:[%s2 + $0x154] sm:$0xf]
  %v494 = vld [vmem:[%s2 + $0x158] sm:$0xf]
  %v495 = vld [vmem:[%s2 + $0x15c] sm:$0xf]
  %v496 = vld [vmem:[%s2 + $0x160] sm:$0xf]
  %v497 = vld [vmem:[%s2 + $0x164] sm:$0xf]
  %v498 = vld [vmem:[%s2 + $0x168] sm:$0xf]
  %v499 = vld [vmem:[%s2 + $0x16c] sm:$0xf]
  %v500 = vld [vmem:[%s2 + $0x170] sm:$0xf]
  %v501 = vld [vmem:[%s2 + $0x174] sm:$0xf]
  %v502 = vld [vmem:[%s2 + $0x178] sm:$0xf]
  %v503 = vld [vmem:[%s2 + $0x17c] sm:$0xf]
  %v600 = vunpack.c.l.b16 %v408
  %v601 = vunpack.c.l.b16 %v409
  %v602 = vunpack.c.l.b16 %v410
  %v603 = vunpack.c.l.b16 %v411
  %v604 = vunpack.c.l.b16 %v412
  %v605 = vunpack.c.l.b16 %v413
  %v606 = vunpack.c.l.b16 %v414
  %v607 = vunpack.c.l.b16 %v415
  %v608 = vunpack.c.l.b16 %v416
  %v609 = vunpack.c.l.b16 %v417
  %v610 = vunpack.c.l.b16 %v418
  %v611 = vunpack.c.l.b16 %v419
  %v612 = vunpack.c.l.b16 %v420
  %v613 = vunpack.c.l.b16 %v421
  %v614 = vunpack.c.l.b16 %v422
  %v615 = vunpack.c.l.b16 %v423
  %v616 = vunpack.c.l.b16 %v424
  %v617 = vunpack.c.l.b16 %v425
  %v618 = vunpack.c.l.b16 %v426
  %v619 = vunpack.c.l.b16 %v427
  %v620 = vunpack.c.l.b16 %v428
  %v621 = vunpack.c.l.b16 %v429
  %v622 = vunpack.c.l.b16 %v430
  %v623 = vunpack.c.l.b16 %v431
  %v624 = vunpack.c.l.b16 %v432
  %v625 = vunpack.c.l.b16 %v433
  %v626 = vunpack.c.l.b16 %v434
  %v627 = vunpack.c.l.b16 %v435
  %v628 = vunpack.c.l.b16 %v436
  %v629 = vunpack.c.l.b16 %v437
  %v630 = vunpack.c.l.b16 %v438
  %v631 = vunpack.c.l.b16 %v439
  %v632 = vunpack.c.l.b16 %v440
  %v633 = vunpack.c.l.b16 %v441
  %v634 = vunpack.c.l.b16 %v442
  %v635 = vunpack.c.l.b16 %v443
  %v636 = vunpack.c.l.b16 %v444
  %v637 = vunpack.c.l.b16 %v445
  %v638 = vunpack.c.l.b16 %v446
  %v639 = vunpack.c.l.b16 %v447
  %v640 = vunpack.c.l.b16 %v448
  %v641 = vunpack.c.l.b16 %v449
  %v642 = vunpack.c.l.b16 %v450
  %v643 = vunpack.c.l.b16 %v451
  %v644 = vunpack.c.l.b16 %v452
  %v645 = vunpack.c.l.b16 %v453
  %v646 = vunpack.c.l.b16 %v454
  %v647 = vunpack.c.l.b16 %v455
  %v648 = vunpack.c.l.b16 %v456
  %v649 = vunpack.c.l.b16 %v457
  %v650 = vunpack.c.l.b16 %v458
  %v651 = vunpack.c.l.b16 %v459
  %v652 = vunpack.c.l.b16 %v460
  %v653 = vunpack.c.l.b16 %v461
  %v654 = vunpack.c.l.b16 %v462
  %v655 = vunpack.c.l.b16 %v463
  %v656 = vunpack.c.l.b16 %v464
  %v657 = vunpack.c.l.b16 %v465
  %v658 = vunpack.c.l.b16 %v466
  %v659 = vunpack.c.l.b16 %v467
  %v660 = vunpack.c.l.b16 %v468
  %v661 = vunpack.c.l.b16 %v469
  %v662 = vunpack.c.l.b16 %v470
  %v663 = vunpack.c.l.b16 %v471
  %v664 = vunpack.c.l.b16 %v472
  %v665 = vunpack.c.l.b16 %v473
  %v666 = vunpack.c.l.b16 %v474
  %v667 = vunpack.c.l.b16 %v475
  %v668 = vunpack.c.l.b16 %v476
  %v669 = vunpack.c.l.b16 %v477
  %v670 = vunpack.c.l.b16 %v478
  %v671 = vunpack.c.l.b16 %v479
  %v672 = vunpack.c.l.b16 %v480
  %v673 = vunpack.c.l.b16 %v481
  %v674 = vunpack.c.l.b16 %v482
  %v675 = vunpack.c.l.b16 %v483
  %v676 = vunpack.c.l.b16 %v484
  %v677 = vunpack.c.l.b16 %v485
  %v678 = vunpack.c.l.b16 %v486
  %v679 = vunpack.c.l.b16 %v487
  %v680 = vunpack.c.l.b16 %v488
  %v681 = vunpack.c.l.b16 %v489
  %v682 = vunpack.c.l.b16 %v490
  %v683 = vunpack.c.l.b16 %v491
  %v684 = vunpack.c.l.b16 %v492
  %v685 = vunpack.c.l.b16 %v493
  %v686 = vunpack.c.l.b16 %v494
  %v687 = vunpack.c.l.b16 %v495
  %v688 = vunpack.c.l.b16 %v496
  %v689 = vunpack.c.l.b16 %v497
  %v690 = vunpack.c.l.b16 %v498
  %v691 = vunpack.c.l.b16 %v499
  %v692 = vunpack.c.l.b16 %v500
  %v693 = vunpack.c.l.b16 %v501
  %v694 = vunpack.c.l.b16 %v502
  %v695 = vunpack.c.l.b16 %v503
  %v696 = vpack.c.b16 %v601, %v600
  %v697 = vpack.c.b16 %v603, %v602
  %v698 = vpack.c.b16 %v605, %v604
  %v699 = vpack.c.b16 %v607, %v606
  %v700 = vpack.c.b16 %v609, %v608
  %v701 = vpack.c.b16 %v611, %v610
  %v702 = vpack.c.b16 %v613, %v612
  %v703 = vpack.c.b16 %v615, %v614
  %v704 = vpack.c.b16 %v617, %v616
  %v705 = vpack.c.b16 %v619, %v618
  %v706 = vpack.c.b16 %v621, %v620
  %v707 = vpack.c.b16 %v623, %v622
  %v708 = vpack.c.b16 %v625, %v624
  %v709 = vpack.c.b16 %v627, %v626
  %v710 = vpack.c.b16 %v629, %v628
  %v711 = vpack.c.b16 %v631, %v630
  %v712 = vpack.c.b16 %v633, %v632
  %v713 = vpack.c.b16 %v635, %v634
  %v714 = vpack.c.b16 %v637, %v636
  %v715 = vpack.c.b16 %v639, %v638
  %v716 = vpack.c.b16 %v641, %v640
  %v717 = vpack.c.b16 %v643, %v642
  %v718 = vpack.c.b16 %v645, %v644
  %v719 = vpack.c.b16 %v647, %v646
  %v720 = vpack.c.b16 %v649, %v648
  %v721 = vpack.c.b16 %v651, %v650
  %v722 = vpack.c.b16 %v653, %v652
  %v723 = vpack.c.b16 %v655, %v654
  %v724 = vpack.c.b16 %v657, %v656
  %v725 = vpack.c.b16 %v659, %v658
  %v726 = vpack.c.b16 %v661, %v660
  %v727 = vpack.c.b16 %v663, %v662
  %v728 = vpack.c.b16 %v665, %v664
  %v729 = vpack.c.b16 %v667, %v666
  %v730 = vpack.c.b16 %v669, %v668
  %v731 = vpack.c.b16 %v671, %v670
  %v732 = vpack.c.b16 %v673, %v672
  %v733 = vpack.c.b16 %v675, %v674
  %v734 = vpack.c.b16 %v677, %v676
  %v735 = vpack.c.b16 %v679, %v678
  %v736 = vpack.c.b16 %v681, %v680
  %v737 = vpack.c.b16 %v683, %v682
  %v738 = vpack.c.b16 %v685, %v684
  %v739 = vpack.c.b16 %v687, %v686
  %v740 = vpack.c.b16 %v689, %v688
  %v741 = vpack.c.b16 %v691, %v690
  %v742 = vpack.c.b16 %v693, %v692
  %v743 = vpack.c.b16 %v695, %v694
  %792 = vmatprep.subr.bf16.mxu0 0
  %793 = vmatpush1.bf16.msra.mxu0 %v703
  %794 = vmatprep.subr.bf16.mxu0 0
  %795 = vmatpush1.bf16.msra.mxu0 %v702
  %796 = vmatprep.subr.bf16.mxu0 0
  %797 = vmatpush1.bf16.msra.mxu0 %v701
  %798 = vmatprep.subr.bf16.mxu0 0
  %799 = vmatpush1.bf16.msra.mxu0 %v700
  %800 = vmatprep.subr.bf16.mxu0 0
  %801 = vmatpush1.bf16.msra.mxu0 %v699
  %802 = vmatprep.subr.bf16.mxu0 0
  %803 = vmatpush1.bf16.msra.mxu0 %v698
  %804 = vmatprep.subr.bf16.mxu0 0
  %805 = vmatpush1.bf16.msra.mxu0 %v697
  %806 = vmatprep.subr.bf16.mxu0 0
  %807 = vmatpush1.bf16.msra.mxu0 %v696
  %808 = vmatprep.subr.bf16.mxu0 0
  %809 = vmatpush2.bf16.msra.mxu0 %v711
  %810 = vmatprep.subr.bf16.mxu0 0
  %811 = vmatpush2.bf16.msra.mxu0 %v710
  %812 = vmatprep.subr.bf16.mxu0 0
  %813 = vmatpush2.bf16.msra.mxu0 %v709
  %814 = vmatprep.subr.bf16.mxu0 0
  %815 = vmatpush2.bf16.msra.mxu0 %v708
  %816 = vmatprep.subr.bf16.mxu0 0
  %817 = vmatpush2.bf16.msra.mxu0 %v707
  %818 = vmatprep.subr.bf16.mxu0 0
  %819 = vmatpush2.bf16.msra.mxu0 %v706
  %820 = vmatprep.subr.bf16.mxu0 0
  %821 = vmatpush2.bf16.msra.mxu0 %v705
  %822 = vmatprep.subr.bf16.mxu0 0
  %823 = vmatpush2.bf16.msra.mxu0 %v704
  %824 = vmatprep.mubr.bf16.mxu0 %v313
  %825 = vmatmul.mubr.bf16.gmra.mxu0 %v312
  %v826 = vpop.f32.mrf.mxu0
  %v827 = vadd.f32 0.0, %v826
  %v828 = vpop.f32.mrf.mxu0
  %v829 = vpop.f32.mrf.mxu0
  %v830 = vadd.f32 0.0, %v829
  %v831 = vpop.f32.mrf.mxu0
  %832 = vmatprep.mubr.bf16.mxu0 %v319
  %833 = vmatmul.mubr.bf16.gmra.mxu0 %v318
  %v834 = vpop.f32.mrf.mxu0
  %v835 = vadd.f32 0.0, %v834
  %v836 = vpop.f32.mrf.mxu0
  %v837 = vpop.f32.mrf.mxu0
  %v838 = vadd.f32 0.0, %v837
  %v839 = vpop.f32.mrf.mxu0
  %840 = vmatprep.mubr.bf16.mxu0 %v325
  %841 = vmatmul.mubr.bf16.gmra.mxu0 %v324
  %v842 = vpop.f32.mrf.mxu0
  %v843 = vadd.f32 0.0, %v842
  %v844 = vpop.f32.mrf.mxu0
  %v845 = vpop.f32.mrf.mxu0
  %v846 = vadd.f32 0.0, %v845
  %v847 = vpop.f32.mrf.mxu0
  %848 = vmatprep.mubr.bf16.mxu0 %v331
  %849 = vmatmul.mubr.bf16.gmra.mxu0 %v330
  %v850 = vpop.f32.mrf.mxu0
  %v851 = vadd.f32 0.0, %v850
  %v852 = vpop.f32.mrf.mxu0
  %v853 = vpop.f32.mrf.mxu0
  %v854 = vadd.f32 0.0, %v853
  %v855 = vpop.f32.mrf.mxu0
  %856 = vmatprep.mubr.bf16.mxu0 %v337
  %857 = vmatmul.mubr.bf16.gmra.mxu0 %v336
  %v858 = vpop.f32.mrf.mxu0
  %v859 = vadd.f32 0.0, %v858
  %v860 = vpop.f32.mrf.mxu0
  %v861 = vpop.f32.mrf.mxu0
  %v862 = vadd.f32 0.0, %v861
  %v863 = vpop.f32.mrf.mxu0
  %864 = vmatprep.mubr.bf16.mxu0 %v343
  %865 = vmatmul.mubr.bf16.gmra.mxu0 %v342
  %v866 = vpop.f32.mrf.mxu0
  %v867 = vadd.f32 0.0, %v866
  %v868 = vpop.f32.mrf.mxu0
  %v869 = vpop.f32.mrf.mxu0
  %v870 = vadd.f32 0.0, %v869
  %v871 = vpop.f32.mrf.mxu0
  %872 = vmatprep.mubr.bf16.mxu0 %v349
  %873 = vmatmul.mubr.bf16.gmra.mxu0 %v348
  %v874 = vpop.f32.mrf.mxu0
  %v875 = vadd.f32 0.0, %v874
  %v876 = vpop.f32.mrf.mxu0
  %v877 = vpop.f32.mrf.mxu0
  %v878 = vadd.f32 0.0, %v877
  %v879 = vpop.f32.mrf.mxu0
  %880 = vmatprep.mubr.bf16.mxu0 %v355
  %881 = vmatmul.mubr.bf16.gmra.mxu0 %v354
  %v882 = vpop.f32.mrf.mxu0
  %v883 = vadd.f32 0.0, %v882
  %v884 = vpop.f32.mrf.mxu0
  %v885 = vpop.f32.mrf.mxu0
  %v886 = vadd.f32 0.0, %v885
  %v887 = vpop.f32.mrf.mxu0
  %888 = vmatprep.mubr.bf16.mxu0 %v361
  %889 = vmatmul.mubr.bf16.gmra.mxu0 %v360
  %v890 = vpop.f32.mrf.mxu0
  %v891 = vadd.f32 0.0, %v890
  %v892 = vpop.f32.mrf.mxu0
  %v893 = vpop.f32.mrf.mxu0
  %v894 = vadd.f32 0.0, %v893
  %v895 = vpop.f32.mrf.mxu0
  %896 = vmatprep.mubr.bf16.mxu0 %v367
  %897 = vmatmul.mubr.bf16.gmra.mxu0 %v366
  %v898 = vpop.f32.mrf.mxu0
  %v899 = vadd.f32 0.0, %v898
  %v900 = vpop.f32.mrf.mxu0
  %v901 = vpop.f32.mrf.mxu0
  %v902 = vadd.f32 0.0, %v901
  %v903 = vpop.f32.mrf.mxu0
  %904 = vmatprep.mubr.bf16.mxu0 %v373
  %905 = vmatmul.mubr.bf16.gmra.mxu0 %v372
  %v906 = vpop.f32.mrf.mxu0
  %v907 = vadd.f32 0.0, %v906
  %v908 = vpop.f32.mrf.mxu0
  %v909 = vpop.f32.mrf.mxu0
  %v910 = vadd.f32 0.0, %v909
  %v911 = vpop.f32.mrf.mxu0
  %912 = vmatprep.mubr.bf16.mxu0 %v379
  %913 = vmatmul.mubr.bf16.gmra.mxu0 %v378
  %v914 = vpop.f32.mrf.mxu0
  %v915 = vadd.f32 0.0, %v914
  %v916 = vpop.f32.mrf.mxu0
  %v917 = vpop.f32.mrf.mxu0
  %v918 = vadd.f32 0.0, %v917
  %v919 = vpop.f32.mrf.mxu0
  %920 = vmatprep.mubr.bf16.mxu0 %v385
  %921 = vmatmul.mubr.bf16.gmra.mxu0 %v384
  %v922 = vpop.f32.mrf.mxu0
  %v923 = vadd.f32 0.0, %v922
  %v924 = vpop.f32.mrf.mxu0
  %v925 = vpop.f32.mrf.mxu0
  %v926 = vadd.f32 0.0, %v925
  %v927 = vpop.f32.mrf.mxu0
  %928 = vmatprep.mubr.bf16.mxu0 %v391
  %929 = vmatmul.mubr.bf16.gmra.mxu0 %v390
  %v930 = vpop.f32.mrf.mxu0
  %v931 = vadd.f32 0.0, %v930
  %v932 = vpop.f32.mrf.mxu0
  %v933 = vpop.f32.mrf.mxu0
  %v934 = vadd.f32 0.0, %v933
  %v935 = vpop.f32.mrf.mxu0
  %936 = vmatprep.mubr.bf16.mxu0 %v397
  %937 = vmatmul.mubr.bf16.gmra.mxu0 %v396
  %v938 = vpop.f32.mrf.mxu0
  %v939 = vadd.f32 0.0, %v938
  %v940 = vpop.f32.mrf.mxu0
  %v941 = vpop.f32.mrf.mxu0
  %v942 = vadd.f32 0.0, %v941
  %v943 = vpop.f32.mrf.mxu0
  %944 = vmatprep.mubr.bf16.mxu0 %v403
  %945 = vmatmul.mubr.bf16.gmra.mxu0 %v402
  %v946 = vpop.f32.mrf.mxu0
  %v947 = vadd.f32 0.0, %v946
  %v948 = vpop.f32.mrf.mxu0
  %v949 = vpop.f32.mrf.mxu0
  %v950 = vadd.f32 0.0, %v949
  %v951 = vpop.f32.mrf.mxu0
  %952 = vdwg.mxu0
  %953 = vmatprep.subr.bf16.mxu0 0
  %954 = vmatpush1.bf16.msra.mxu0 %v719
  %955 = vmatprep.subr.bf16.mxu0 0
  %956 = vmatpush1.bf16.msra.mxu0 %v718
  %957 = vmatprep.subr.bf16.mxu0 0
  %958 = vmatpush1.bf16.msra.mxu0 %v717
  %959 = vmatprep.subr.bf16.mxu0 0
  %960 = vmatpush1.bf16.msra.mxu0 %v716
  %961 = vmatprep.subr.bf16.mxu0 0
  %962 = vmatpush1.bf16.msra.mxu0 %v715
  %963 = vmatprep.subr.bf16.mxu0 0
  %964 = vmatpush1.bf16.msra.mxu0 %v714
  %965 = vmatprep.subr.bf16.mxu0 0
  %966 = vmatpush1.bf16.msra.mxu0 %v713
  %967 = vmatprep.subr.bf16.mxu0 0
  %968 = vmatpush1.bf16.msra.mxu0 %v712
  %969 = vmatprep.subr.bf16.mxu0 0
  %970 = vmatpush2.bf16.msra.mxu0 %v727
  %971 = vmatprep.subr.bf16.mxu0 0
  %972 = vmatpush2.bf16.msra.mxu0 %v726
  %973 = vmatprep.subr.bf16.mxu0 0
  %974 = vmatpush2.bf16.msra.mxu0 %v725
  %975 = vmatprep.subr.bf16.mxu0 0
  %976 = vmatpush2.bf16.msra.mxu0 %v724
  %977 = vmatprep.subr.bf16.mxu0 0
  %978 = vmatpush2.bf16.msra.mxu0 %v723
  %979 = vmatprep.subr.bf16.mxu0 0
  %980 = vmatpush2.bf16.msra.mxu0 %v722
  %981 = vmatprep.subr.bf16.mxu0 0
  %982 = vmatpush2.bf16.msra.mxu0 %v721
  %983 = vmatprep.subr.bf16.mxu0 0
  %984 = vmatpush2.bf16.msra.mxu0 %v720
  %985 = vmatprep.mubr.bf16.mxu0 %v315
  %986 = vmatmul.mubr.bf16.gmra.mxu0 %v314
  %v987 = vpop.f32.mrf.mxu0
  %v988 = vadd.f32 %v827, %v987
  %v989 = vpop.f32.mrf.mxu0
  %v990 = vpop.f32.mrf.mxu0
  %v991 = vadd.f32 %v830, %v990
  %v992 = vpop.f32.mrf.mxu0
  %993 = vmatprep.mubr.bf16.mxu0 %v321
  %994 = vmatmul.mubr.bf16.gmra.mxu0 %v320
  %v995 = vpop.f32.mrf.mxu0
  %v996 = vadd.f32 %v835, %v995
  %v997 = vpop.f32.mrf.mxu0
  %v998 = vpop.f32.mrf.mxu0
  %v999 = vadd.f32 %v838, %v998
  %v1000 = vpop.f32.mrf.mxu0
  %1001 = vmatprep.mubr.bf16.mxu0 %v327
  %1002 = vmatmul.mubr.bf16.gmra.mxu0 %v326
  %v1003 = vpop.f32.mrf.mxu0
  %v1004 = vadd.f32 %v843, %v1003
  %v1005 = vpop.f32.mrf.mxu0
  %v1006 = vpop.f32.mrf.mxu0
  %v1007 = vadd.f32 %v846, %v1006
  %v1008 = vpop.f32.mrf.mxu0
  %1009 = vmatprep.mubr.bf16.mxu0 %v333
  %1010 = vmatmul.mubr.bf16.gmra.mxu0 %v332
  %v1011 = vpop.f32.mrf.mxu0
  %v1012 = vadd.f32 %v851, %v1011
  %v1013 = vpop.f32.mrf.mxu0
  %v1014 = vpop.f32.mrf.mxu0
  %v1015 = vadd.f32 %v854, %v1014
  %v1016 = vpop.f32.mrf.mxu0
  %1017 = vmatprep.mubr.bf16.mxu0 %v339
  %1018 = vmatmul.mubr.bf16.gmra.mxu0 %v338
  %v1019 = vpop.f32.mrf.mxu0
  %v1020 = vadd.f32 %v859, %v1019
  %v1021 = vpop.f32.mrf.mxu0
  %v1022 = vpop.f32.mrf.mxu0
  %v1023 = vadd.f32 %v862, %v1022
  %v1024 = vpop.f32.mrf.mxu0
  %1025 = vmatprep.mubr.bf16.mxu0 %v345
  %1026 = vmatmul.mubr.bf16.gmra.mxu0 %v344
  %v1027 = vpop.f32.mrf.mxu0
  %v1028 = vadd.f32 %v867, %v1027
  %v1029 = vpop.f32.mrf.mxu0
  %v1030 = vpop.f32.mrf.mxu0
  %v1031 = vadd.f32 %v870, %v1030
  %v1032 = vpop.f32.mrf.mxu0
  %1033 = vmatprep.mubr.bf16.mxu0 %v351
  %1034 = vmatmul.mubr.bf16.gmra.mxu0 %v350
  %v1035 = vpop.f32.mrf.mxu0
  %v1036 = vadd.f32 %v875, %v1035
  %v1037 = vpop.f32.mrf.mxu0
  %v1038 = vpop.f32.mrf.mxu0
  %v1039 = vadd.f32 %v878, %v1038
  %v1040 = vpop.f32.mrf.mxu0
  %1041 = vmatprep.mubr.bf16.mxu0 %v357
  %1042 = vmatmul.mubr.bf16.gmra.mxu0 %v356
  %v1043 = vpop.f32.mrf.mxu0
  %v1044 = vadd.f32 %v883, %v1043
  %v1045 = vpop.f32.mrf.mxu0
  %v1046 = vpop.f32.mrf.mxu0
  %v1047 = vadd.f32 %v886, %v1046
  %v1048 = vpop.f32.mrf.mxu0
  %1049 = vmatprep.mubr.bf16.mxu0 %v363
  %1050 = vmatmul.mubr.bf16.gmra.mxu0 %v362
  %v1051 = vpop.f32.mrf.mxu0
  %v1052 = vadd.f32 %v891, %v1051
  %v1053 = vpop.f32.mrf.mxu0
  %v1054 = vpop.f32.mrf.mxu0
  %v1055 = vadd.f32 %v894, %v1054
  %v1056 = vpop.f32.mrf.mxu0
  %1057 = vmatprep.mubr.bf16.mxu0 %v369
  %1058 = vmatmul.mubr.bf16.gmra.mxu0 %v368
  %v1059 = vpop.f32.mrf.mxu0
  %v1060 = vadd.f32 %v899, %v1059
  %v1061 = vpop.f32.mrf.mxu0
  %v1062 = vpop.f32.mrf.mxu0
  %v1063 = vadd.f32 %v902, %v1062
  %v1064 = vpop.f32.mrf.mxu0
  %1065 = vmatprep.mubr.bf16.mxu0 %v375
  %1066 = vmatmul.mubr.bf16.gmra.mxu0 %v374
  %v1067 = vpop.f32.mrf.mxu0
  %v1068 = vadd.f32 %v907, %v1067
  %v1069 = vpop.f32.mrf.mxu0
  %v1070 = vpop.f32.mrf.mxu0
  %v1071 = vadd.f32 %v910, %v1070
  %v1072 = vpop.f32.mrf.mxu0
  %1073 = vmatprep.mubr.bf16.mxu0 %v381
  %1074 = vmatmul.mubr.bf16.gmra.mxu0 %v380
  %v1075 = vpop.f32.mrf.mxu0
  %v1076 = vadd.f32 %v915, %v1075
  %v1077 = vpop.f32.mrf.mxu0
  %v1078 = vpop.f32.mrf.mxu0
  %v1079 = vadd.f32 %v918, %v1078
  %v1080 = vpop.f32.mrf.mxu0
  %1081 = vmatprep.mubr.bf16.mxu0 %v387
  %1082 = vmatmul.mubr.bf16.gmra.mxu0 %v386
  %v1083 = vpop.f32.mrf.mxu0
  %v1084 = vadd.f32 %v923, %v1083
  %v1085 = vpop.f32.mrf.mxu0
  %v1086 = vpop.f32.mrf.mxu0
  %v1087 = vadd.f32 %v926, %v1086
  %v1088 = vpop.f32.mrf.mxu0
  %1089 = vmatprep.mubr.bf16.mxu0 %v393
  %1090 = vmatmul.mubr.bf16.gmra.mxu0 %v392
  %v1091 = vpop.f32.mrf.mxu0
  %v1092 = vadd.f32 %v931, %v1091
  %v1093 = vpop.f32.mrf.mxu0
  %v1094 = vpop.f32.mrf.mxu0
  %v1095 = vadd.f32 %v934, %v1094
  %v1096 = vpop.f32.mrf.mxu0
  %1097 = vmatprep.mubr.bf16.mxu0 %v399
  %1098 = vmatmul.mubr.bf16.gmra.mxu0 %v398
  %v1099 = vpop.f32.mrf.mxu0
  %v1100 = vadd.f32 %v939, %v1099
  %v1101 = vpop.f32.mrf.mxu0
  %v1102 = vpop.f32.mrf.mxu0
  %v1103 = vadd.f32 %v942, %v1102
  %v1104 = vpop.f32.mrf.mxu0
  %1105 = vmatprep.mubr.bf16.mxu0 %v405
  %1106 = vmatmul.mubr.bf16.gmra.mxu0 %v404
  %v1107 = vpop.f32.mrf.mxu0
  %v1108 = vadd.f32 %v947, %v1107
  %v1109 = vpop.f32.mrf.mxu0
  %v1110 = vpop.f32.mrf.mxu0
  %v1111 = vadd.f32 %v950, %v1110
  %v1112 = vpop.f32.mrf.mxu0
  %1113 = vdwg.mxu0
  %1114 = vmatprep.subr.bf16.mxu0 0
  %1115 = vmatpush1.bf16.msra.mxu0 %v735
  %1116 = vmatprep.subr.bf16.mxu0 0
  %1117 = vmatpush1.bf16.msra.mxu0 %v734
  %1118 = vmatprep.subr.bf16.mxu0 0
  %1119 = vmatpush1.bf16.msra.mxu0 %v733
  %1120 = vmatprep.subr.bf16.mxu0 0
  %1121 = vmatpush1.bf16.msra.mxu0 %v732
  %1122 = vmatprep.subr.bf16.mxu0 0
  %1123 = vmatpush1.bf16.msra.mxu0 %v731
  %1124 = vmatprep.subr.bf16.mxu0 0
  %1125 = vmatpush1.bf16.msra.mxu0 %v730
  %1126 = vmatprep.subr.bf16.mxu0 0
  %1127 = vmatpush1.bf16.msra.mxu0 %v729
  %1128 = vmatprep.subr.bf16.mxu0 0
  %1129 = vmatpush1.bf16.msra.mxu0 %v728
  %1130 = vmatprep.subr.bf16.mxu0 0
  %1131 = vmatpush2.bf16.msra.mxu0 %v743
  %1132 = vmatprep.subr.bf16.mxu0 0
  %1133 = vmatpush2.bf16.msra.mxu0 %v742
  %1134 = vmatprep.subr.bf16.mxu0 0
  %1135 = vmatpush2.bf16.msra.mxu0 %v741
  %1136 = vmatprep.subr.bf16.mxu0 0
  %1137 = vmatpush2.bf16.msra.mxu0 %v740
  %1138 = vmatprep.subr.bf16.mxu0 0
  %1139 = vmatpush2.bf16.msra.mxu0 %v739
  %1140 = vmatprep.subr.bf16.mxu0 0
  %1141 = vmatpush2.bf16.msra.mxu0 %v738
  %1142 = vmatprep.subr.bf16.mxu0 0
  %1143 = vmatpush2.bf16.msra.mxu0 %v737
  %1144 = vmatprep.subr.bf16.mxu0 0
  %1145 = vmatpush2.bf16.msra.mxu0 %v736
  %1146 = vmatprep.mubr.bf16.mxu0 %v317
  %1147 = vmatmul.mubr.bf16.gmra.mxu0 %v316
  %v1148 = vpop.f32.mrf.mxu0
  %v1149 = vadd.f32 %v988, %v1148
  %v1150 = vpop.f32.mrf.mxu0
  %v1151 = vpop.f32.mrf.mxu0
  %v1152 = vadd.f32 %v991, %v1151
  %v1153 = vpop.f32.mrf.mxu0
  %1154 = vmatprep.mubr.bf16.mxu0 %v323
  %1155 = vmatmul.mubr.bf16.gmra.mxu0 %v322
  %v1156 = vpop.f32.mrf.mxu0
  %v1157 = vadd.f32 %v996, %v1156
  %v1158 = vpop.f32.mrf.mxu0
  %v1159 = vpop.f32.mrf.mxu0
  %v1160 = vadd.f32 %v999, %v1159
  %v1161 = vpop.f32.mrf.mxu0
  %1162 = vmatprep.mubr.bf16.mxu0 %v329
  %1163 = vmatmul.mubr.bf16.gmra.mxu0 %v328
  %v1164 = vpop.f32.mrf.mxu0
  %v1165 = vadd.f32 %v1004, %v1164
  %v1166 = vpop.f32.mrf.mxu0
  %v1167 = vpop.f32.mrf.mxu0
  %v1168 = vadd.f32 %v1007, %v1167
  %v1169 = vpop.f32.mrf.mxu0
  %1170 = vmatprep.mubr.bf16.mxu0 %v335
  %1171 = vmatmul.mubr.bf16.gmra.mxu0 %v334
  %v1172 = vpop.f32.mrf.mxu0
  %v1173 = vadd.f32 %v1012, %v1172
  %v1174 = vpop.f32.mrf.mxu0
  %v1175 = vpop.f32.mrf.mxu0
  %v1176 = vadd.f32 %v1015, %v1175
  %v1177 = vpop.f32.mrf.mxu0
  %1178 = vmatprep.mubr.bf16.mxu0 %v341
  %1179 = vmatmul.mubr.bf16.gmra.mxu0 %v340
  %v1180 = vpop.f32.mrf.mxu0
  %v1181 = vadd.f32 %v1020, %v1180
  %v1182 = vpop.f32.mrf.mxu0
  %v1183 = vpop.f32.mrf.mxu0
  %v1184 = vadd.f32 %v1023, %v1183
  %v1185 = vpop.f32.mrf.mxu0
  %1186 = vmatprep.mubr.bf16.mxu0 %v347
  %1187 = vmatmul.mubr.bf16.gmra.mxu0 %v346
  %v1188 = vpop.f32.mrf.mxu0
  %v1189 = vadd.f32 %v1028, %v1188
  %v1190 = vpop.f32.mrf.mxu0
  %v1191 = vpop.f32.mrf.mxu0
  %v1192 = vadd.f32 %v1031, %v1191
  %v1193 = vpop.f32.mrf.mxu0
  %1194 = vmatprep.mubr.bf16.mxu0 %v353
  %1195 = vmatmul.mubr.bf16.gmra.mxu0 %v352
  %v1196 = vpop.f32.mrf.mxu0
  %v1197 = vadd.f32 %v1036, %v1196
  %v1198 = vpop.f32.mrf.mxu0
  %v1199 = vpop.f32.mrf.mxu0
  %v1200 = vadd.f32 %v1039, %v1199
  %v1201 = vpop.f32.mrf.mxu0
  %1202 = vmatprep.mubr.bf16.mxu0 %v359
  %1203 = vmatmul.mubr.bf16.gmra.mxu0 %v358
  %v1204 = vpop.f32.mrf.mxu0
  %v1205 = vadd.f32 %v1044, %v1204
  %v1206 = vpop.f32.mrf.mxu0
  %v1207 = vpop.f32.mrf.mxu0
  %v1208 = vadd.f32 %v1047, %v1207
  %v1209 = vpop.f32.mrf.mxu0
  %1210 = vmatprep.mubr.bf16.mxu0 %v365
  %1211 = vmatmul.mubr.bf16.gmra.mxu0 %v364
  %v1212 = vpop.f32.mrf.mxu0
  %v1213 = vadd.f32 %v1052, %v1212
  %v1214 = vpop.f32.mrf.mxu0
  %v1215 = vpop.f32.mrf.mxu0
  %v1216 = vadd.f32 %v1055, %v1215
  %v1217 = vpop.f32.mrf.mxu0
  %1218 = vmatprep.mubr.bf16.mxu0 %v371
  %1219 = vmatmul.mubr.bf16.gmra.mxu0 %v370
  %v1220 = vpop.f32.mrf.mxu0
  %v1221 = vadd.f32 %v1060, %v1220
  %v1222 = vpop.f32.mrf.mxu0
  %v1223 = vpop.f32.mrf.mxu0
  %v1224 = vadd.f32 %v1063, %v1223
  %v1225 = vpop.f32.mrf.mxu0
  %1226 = vmatprep.mubr.bf16.mxu0 %v377
  %1227 = vmatmul.mubr.bf16.gmra.mxu0 %v376
  %v1228 = vpop.f32.mrf.mxu0
  %v1229 = vadd.f32 %v1068, %v1228
  %v1230 = vpop.f32.mrf.mxu0
  %v1231 = vpop.f32.mrf.mxu0
  %v1232 = vadd.f32 %v1071, %v1231
  %v1233 = vpop.f32.mrf.mxu0
  %1234 = vmatprep.mubr.bf16.mxu0 %v383
  %1235 = vmatmul.mubr.bf16.gmra.mxu0 %v382
  %v1236 = vpop.f32.mrf.mxu0
  %v1237 = vadd.f32 %v1076, %v1236
  %v1238 = vpop.f32.mrf.mxu0
  %v1239 = vpop.f32.mrf.mxu0
  %v1240 = vadd.f32 %v1079, %v1239
  %v1241 = vpop.f32.mrf.mxu0
  %1242 = vmatprep.mubr.bf16.mxu0 %v389
  %1243 = vmatmul.mubr.bf16.gmra.mxu0 %v388
  %v1244 = vpop.f32.mrf.mxu0
  %v1245 = vadd.f32 %v1084, %v1244
  %v1246 = vpop.f32.mrf.mxu0
  %v1247 = vpop.f32.mrf.mxu0
  %v1248 = vadd.f32 %v1087, %v1247
  %v1249 = vpop.f32.mrf.mxu0
  %1250 = vmatprep.mubr.bf16.mxu0 %v395
  %1251 = vmatmul.mubr.bf16.gmra.mxu0 %v394
  %v1252 = vpop.f32.mrf.mxu0
  %v1253 = vadd.f32 %v1092, %v1252
  %v1254 = vpop.f32.mrf.mxu0
  %v1255 = vpop.f32.mrf.mxu0
  %v1256 = vadd.f32 %v1095, %v1255
  %v1257 = vpop.f32.mrf.mxu0
  %1258 = vmatprep.mubr.bf16.mxu0 %v401
  %1259 = vmatmul.mubr.bf16.gmra.mxu0 %v400
  %v1260 = vpop.f32.mrf.mxu0
  %v1261 = vadd.f32 %v1100, %v1260
  %v1262 = vpop.f32.mrf.mxu0
  %v1263 = vpop.f32.mrf.mxu0
  %v1264 = vadd.f32 %v1103, %v1263
  %v1265 = vpop.f32.mrf.mxu0
  %1266 = vmatprep.mubr.bf16.mxu0 %v407
  %1267 = vmatmul.mubr.bf16.gmra.mxu0 %v406
  %v1268 = vpop.f32.mrf.mxu0
  %v1269 = vadd.f32 %v1108, %v1268
  %v1270 = vpop.f32.mrf.mxu0
  %v1271 = vpop.f32.mrf.mxu0
  %v1272 = vadd.f32 %v1111, %v1271
  %v1273 = vpop.f32.mrf.mxu0
  %1274 = vdwg.mxu0
  %v1275 = vpack.c.bf16 %v1152, %v1149
  %v1276 = vpack.c.bf16 %v1160, %v1157
  %v1277 = vpack.c.bf16 %v1168, %v1165
  %v1278 = vpack.c.bf16 %v1176, %v1173
  %v1279 = vpack.c.bf16 %v1184, %v1181
  %v1280 = vpack.c.bf16 %v1192, %v1189
  %v1281 = vpack.c.bf16 %v1200, %v1197
  %v1282 = vpack.c.bf16 %v1208, %v1205
  %v1283 = vpack.c.bf16 %v1216, %v1213
  %v1284 = vpack.c.bf16 %v1224, %v1221
  %v1285 = vpack.c.bf16 %v1232, %v1229
  %v1286 = vpack.c.bf16 %v1240, %v1237
  %v1287 = vpack.c.bf16 %v1248, %v1245
  %v1288 = vpack.c.bf16 %v1256, %v1253
  %v1289 = vpack.c.bf16 %v1264, %v1261
  %v1290 = vpack.c.bf16 %v1272, %v1269
  %1291 = vmatprep.subr.bf16.mxu0 0
  %1292 = vmatpush1.bf16.msra.mxu0 %v1282
  %1293 = vmatprep.subr.bf16.mxu0 0
  %1294 = vmatpush1.bf16.msra.mxu0 %v1281
  %1295 = vmatprep.subr.bf16.mxu0 0
  %1296 = vmatpush1.bf16.msra.mxu0 %v1280
  %1297 = vmatprep.subr.bf16.mxu0 0
  %1298 = vmatpush1.bf16.msra.mxu0 %v1279
  %1299 = vmatprep.subr.bf16.mxu0 0
  %1300 = vmatpush1.bf16.msra.mxu0 %v1278
  %1301 = vmatprep.subr.bf16.mxu0 0
  %1302 = vmatpush1.bf16.msra.mxu0 %v1277
  %1303 = vmatprep.subr.bf16.mxu0 0
  %1304 = vmatpush1.bf16.msra.mxu0 %v1276
  %1305 = vmatprep.subr.bf16.mxu0 0
  %1306 = vmatpush1.bf16.msra.mxu0 %v1275
  %1307 = vmatprep.subr.bf16.mxu0 0
  %1308 = vmatpush2.bf16.msra.mxu0 %v1290
  %1309 = vmatprep.subr.bf16.mxu0 0
  %1310 = vmatpush2.bf16.msra.mxu0 %v1289
  %1311 = vmatprep.subr.bf16.mxu0 0
  %1312 = vmatpush2.bf16.msra.mxu0 %v1288
  %1313 = vmatprep.subr.bf16.mxu0 0
  %1314 = vmatpush2.bf16.msra.mxu0 %v1287
  %1315 = vmatprep.subr.bf16.mxu0 0
  %1316 = vmatpush2.bf16.msra.mxu0 %v1286
  %1317 = vmatprep.subr.bf16.mxu0 0
  %1318 = vmatpush2.bf16.msra.mxu0 %v1285
  %1319 = vmatprep.subr.bf16.mxu0 0
  %1320 = vmatpush2.bf16.msra.mxu0 %v1284
  %1321 = vmatprep.subr.bf16.mxu0 0
  %1322 = vmatpush2.bf16.msra.mxu0 %v1283
  %1323 = vmatprep.mubr.bf16.mxu0 %v89
  %1324 = vmatmul.mubr.bf16.gmra.mxu0 %v88
  %v1325 = vpop.f32.mrf.mxu0
  %v1326 = vadd.f32 0.0, %v1325
  %v1327 = vpop.f32.mrf.mxu0
  %v1328 = vpop.f32.mrf.mxu0
  %v1329 = vadd.f32 0.0, %v1328
  %v1330 = vpop.f32.mrf.mxu0
  %1331 = vmatprep.mubr.bf16.mxu0 %v91
  %1332 = vmatmul.mubr.bf16.gmra.mxu0 %v90
  %v1333 = vpop.f32.mrf.mxu0
  %v1334 = vadd.f32 0.0, %v1333
  %v1335 = vpop.f32.mrf.mxu0
  %v1336 = vpop.f32.mrf.mxu0
  %v1337 = vadd.f32 0.0, %v1336
  %v1338 = vpop.f32.mrf.mxu0
  %1339 = vmatprep.mubr.bf16.mxu0 %v93
  %1340 = vmatmul.mubr.bf16.gmra.mxu0 %v92
  %v1341 = vpop.f32.mrf.mxu0
  %v1342 = vadd.f32 0.0, %v1341
  %v1343 = vpop.f32.mrf.mxu0
  %v1344 = vpop.f32.mrf.mxu0
  %v1345 = vadd.f32 0.0, %v1344
  %v1346 = vpop.f32.mrf.mxu0
  %1347 = vmatprep.mubr.bf16.mxu0 %v95
  %1348 = vmatmul.mubr.bf16.gmra.mxu0 %v94
  %v1349 = vpop.f32.mrf.mxu0
  %v1350 = vadd.f32 0.0, %v1349
  %v1351 = vpop.f32.mrf.mxu0
  %v1352 = vpop.f32.mrf.mxu0
  %v1353 = vadd.f32 0.0, %v1352
  %v1354 = vpop.f32.mrf.mxu0
  %1355 = vmatprep.mubr.bf16.mxu0 %v97
  %1356 = vmatmul.mubr.bf16.gmra.mxu0 %v96
  %v1357 = vpop.f32.mrf.mxu0
  %v1358 = vadd.f32 0.0, %v1357
  %v1359 = vpop.f32.mrf.mxu0
  %v1360 = vpop.f32.mrf.mxu0
  %v1361 = vadd.f32 0.0, %v1360
  %v1362 = vpop.f32.mrf.mxu0
  %1363 = vmatprep.mubr.bf16.mxu0 %v99
  %1364 = vmatmul.mubr.bf16.gmra.mxu0 %v98
  %v1365 = vpop.f32.mrf.mxu0
  %v1366 = vadd.f32 0.0, %v1365
  %v1367 = vpop.f32.mrf.mxu0
  %v1368 = vpop.f32.mrf.mxu0
  %v1369 = vadd.f32 0.0, %v1368
  %v1370 = vpop.f32.mrf.mxu0
  %1371 = vmatprep.mubr.bf16.mxu0 %v101
  %1372 = vmatmul.mubr.bf16.gmra.mxu0 %v100
  %v1373 = vpop.f32.mrf.mxu0
  %v1374 = vadd.f32 0.0, %v1373
  %v1375 = vpop.f32.mrf.mxu0
  %v1376 = vpop.f32.mrf.mxu0
  %v1377 = vadd.f32 0.0, %v1376
  %v1378 = vpop.f32.mrf.mxu0
  %1379 = vmatprep.mubr.bf16.mxu0 %v103
  %1380 = vmatmul.mubr.bf16.gmra.mxu0 %v102
  %v1381 = vpop.f32.mrf.mxu0
  %v1382 = vadd.f32 0.0, %v1381
  %v1383 = vpop.f32.mrf.mxu0
  %v1384 = vpop.f32.mrf.mxu0
  %v1385 = vadd.f32 0.0, %v1384
  %v1386 = vpop.f32.mrf.mxu0
  %1387 = vmatprep.mubr.bf16.mxu0 %v105
  %1388 = vmatmul.mubr.bf16.gmra.mxu0 %v104
  %v1389 = vpop.f32.mrf.mxu0
  %v1390 = vadd.f32 0.0, %v1389
  %v1391 = vpop.f32.mrf.mxu0
  %v1392 = vpop.f32.mrf.mxu0
  %v1393 = vadd.f32 0.0, %v1392
  %v1394 = vpop.f32.mrf.mxu0
  %1395 = vmatprep.mubr.bf16.mxu0 %v107
  %1396 = vmatmul.mubr.bf16.gmra.mxu0 %v106
  %v1397 = vpop.f32.mrf.mxu0
  %v1398 = vadd.f32 0.0, %v1397
  %v1399 = vpop.f32.mrf.mxu0
  %v1400 = vpop.f32.mrf.mxu0
  %v1401 = vadd.f32 0.0, %v1400
  %v1402 = vpop.f32.mrf.mxu0
  %1403 = vmatprep.mubr.bf16.mxu0 %v109
  %1404 = vmatmul.mubr.bf16.gmra.mxu0 %v108
  %v1405 = vpop.f32.mrf.mxu0
  %v1406 = vadd.f32 0.0, %v1405
  %v1407 = vpop.f32.mrf.mxu0
  %v1408 = vpop.f32.mrf.mxu0
  %v1409 = vadd.f32 0.0, %v1408
  %v1410 = vpop.f32.mrf.mxu0
  %1411 = vmatprep.mubr.bf16.mxu0 %v111
  %1412 = vmatmul.mubr.bf16.gmra.mxu0 %v110
  %v1413 = vpop.f32.mrf.mxu0
  %v1414 = vadd.f32 0.0, %v1413
  %v1415 = vpop.f32.mrf.mxu0
  %v1416 = vpop.f32.mrf.mxu0
  %v1417 = vadd.f32 0.0, %v1416
  %v1418 = vpop.f32.mrf.mxu0
  %1419 = vmatprep.mubr.bf16.mxu0 %v113
  %1420 = vmatmul.mubr.bf16.gmra.mxu0 %v112
  %v1421 = vpop.f32.mrf.mxu0
  %v1422 = vadd.f32 0.0, %v1421
  %v1423 = vpop.f32.mrf.mxu0
  %v1424 = vpop.f32.mrf.mxu0
  %v1425 = vadd.f32 0.0, %v1424
  %v1426 = vpop.f32.mrf.mxu0
  %1427 = vmatprep.mubr.bf16.mxu0 %v115
  %1428 = vmatmul.mubr.bf16.gmra.mxu0 %v114
  %v1429 = vpop.f32.mrf.mxu0
  %v1430 = vadd.f32 0.0, %v1429
  %v1431 = vpop.f32.mrf.mxu0
  %v1432 = vpop.f32.mrf.mxu0
  %v1433 = vadd.f32 0.0, %v1432
  %v1434 = vpop.f32.mrf.mxu0
  %1435 = vmatprep.mubr.bf16.mxu0 %v117
  %1436 = vmatmul.mubr.bf16.gmra.mxu0 %v116
  %v1437 = vpop.f32.mrf.mxu0
  %v1438 = vadd.f32 0.0, %v1437
  %v1439 = vpop.f32.mrf.mxu0
  %v1440 = vpop.f32.mrf.mxu0
  %v1441 = vadd.f32 0.0, %v1440
  %v1442 = vpop.f32.mrf.mxu0
  %1443 = vmatprep.mubr.bf16.mxu0 %v119
  %1444 = vmatmul.mubr.bf16.gmra.mxu0 %v118
  %v1445 = vpop.f32.mrf.mxu0
  %v1446 = vadd.f32 0.0, %v1445
  %v1447 = vpop.f32.mrf.mxu0
  %v1448 = vpop.f32.mrf.mxu0
  %v1449 = vadd.f32 0.0, %v1448
  %v1450 = vpop.f32.mrf.mxu0
  %1451 = vdwg.mxu0
  %v1452 = vpack.c.bf16 %v1329, %v1326
  %v1453 = vpack.c.bf16 %v1337, %v1334
  %v1454 = vpack.c.bf16 %v1345, %v1342
  %v1455 = vpack.c.bf16 %v1353, %v1350
  %v1456 = vpack.c.bf16 %v1361, %v1358
  %v1457 = vpack.c.bf16 %v1369, %v1366
  %v1458 = vpack.c.bf16 %v1377, %v1374
  %v1459 = vpack.c.bf16 %v1385, %v1382
  %v1460 = vpack.c.bf16 %v1393, %v1390
  %v1461 = vpack.c.bf16 %v1401, %v1398
  %v1462 = vpack.c.bf16 %v1409, %v1406
  %v1463 = vpack.c.bf16 %v1417, %v1414
  %v1464 = vpack.c.bf16 %v1425, %v1422
  %v1465 = vpack.c.bf16 %v1433, %v1430
  %v1466 = vpack.c.bf16 %v1441, %v1438
  %v1467 = vpack.c.bf16 %v1449, %v1446
  %v1468 = vld [vmem:[%s3] sm:$0xf]
  %v1469 = vld [vmem:[%s3 + $0x4] sm:$0xf]
  %v1470 = vld [vmem:[%s3 + $0x8] sm:$0xf]
  %v1471 = vld [vmem:[%s3 + $0xc] sm:$0xf]
  %v1472 = vld [vmem:[%s3 + $0x10] sm:$0xf]
  %v1473 = vld [vmem:[%s3 + $0x14] sm:$0xf]
  %v1474 = vld [vmem:[%s3 + $0x18] sm:$0xf]
  %v1475 = vld [vmem:[%s3 + $0x1c] sm:$0xf]
  %v1476 = vld [vmem:[%s3 + $0x20] sm:$0xf]
  %v1477 = vld [vmem:[%s3 + $0x24] sm:$0xf]
  %v1478 = vld [vmem:[%s3 + $0x28] sm:$0xf]
  %v1479 = vld [vmem:[%s3 + $0x2c] sm:$0xf]
  %v1480 = vld [vmem:[%s3 + $0x30] sm:$0xf]
  %v1481 = vld [vmem:[%s3 + $0x34] sm:$0xf]
  %v1482 = vld [vmem:[%s3 + $0x38] sm:$0xf]
  %v1483 = vld [vmem:[%s3 + $0x3c] sm:$0xf]
  %v1484 = vld [vmem:[%s4] sm:$0x1]
  %v1486 = vlaneseq
  %v1487 = vshrl.u32 %v1486, 7
  %v1488 = vsub.s32 0, %v1487
  %v1489 = vrot.slane %v1484, %v1488
  %v1507 = vunpack.c.l.b16 %v1468
  %v1508 = vunpack.c.l.b16 %v1469
  %v1509 = vunpack.c.l.b16 %v1470
  %v1510 = vunpack.c.l.b16 %v1471
  %v1511 = vunpack.c.l.b16 %v1472
  %v1512 = vunpack.c.l.b16 %v1473
  %v1513 = vunpack.c.l.b16 %v1474
  %v1514 = vunpack.c.l.b16 %v1475
  %v1515 = vunpack.c.l.b16 %v1476
  %v1516 = vunpack.c.l.b16 %v1477
  %v1517 = vunpack.c.l.b16 %v1478
  %v1518 = vunpack.c.l.b16 %v1479
  %v1519 = vunpack.c.l.b16 %v1480
  %v1520 = vunpack.c.l.b16 %v1481
  %v1521 = vunpack.c.l.b16 %v1482
  %v1522 = vunpack.c.l.b16 %v1483
  %v1523 = vpack.c.b16 %v1508, %v1507
  %v1524 = vpack.c.b16 %v1510, %v1509
  %v1525 = vpack.c.b16 %v1512, %v1511
  %v1526 = vpack.c.b16 %v1514, %v1513
  %v1527 = vpack.c.b16 %v1516, %v1515
  %v1528 = vpack.c.b16 %v1518, %v1517
  %v1529 = vpack.c.b16 %v1520, %v1519
  %v1530 = vpack.c.b16 %v1522, %v1521
  %1539 = vmatprep.subr.bf16.mxu0 0
  %1540 = vmatpush1.bf16.msra.mxu0 %v1530
  %1541 = vmatprep.subr.bf16.mxu0 0
  %1542 = vmatpush1.bf16.msra.mxu0 %v1529
  %1543 = vmatprep.subr.bf16.mxu0 0
  %1544 = vmatpush1.bf16.msra.mxu0 %v1528
  %1545 = vmatprep.subr.bf16.mxu0 0
  %1546 = vmatpush1.bf16.msra.mxu0 %v1527
  %1547 = vmatprep.subr.bf16.mxu0 0
  %1548 = vmatpush1.bf16.msra.mxu0 %v1526
  %1549 = vmatprep.subr.bf16.mxu0 0
  %1550 = vmatpush1.bf16.msra.mxu0 %v1525
  %1551 = vmatprep.subr.bf16.mxu0 0
  %1552 = vmatpush1.bf16.msra.mxu0 %v1524
  %1553 = vmatprep.subr.bf16.mxu0 0
  %1554 = vmatpush1.bf16.msra.mxu0 %v1523
  %1555 = vmatprep.subr.bf16.mxu0 0
  %1556 = vmatpush2.bf16.msra.mxu0 0
  %1557 = vmatprep.subr.bf16.mxu0 0
  %1558 = vmatpush2.bf16.msra.mxu0 0
  %1559 = vmatprep.subr.bf16.mxu0 0
  %1560 = vmatpush2.bf16.msra.mxu0 0
  %1561 = vmatprep.subr.bf16.mxu0 0
  %1562 = vmatpush2.bf16.msra.mxu0 0
  %1563 = vmatprep.subr.bf16.mxu0 0
  %1564 = vmatpush2.bf16.msra.mxu0 0
  %1565 = vmatprep.subr.bf16.mxu0 0
  %1566 = vmatpush2.bf16.msra.mxu0 0
  %1567 = vmatprep.subr.bf16.mxu0 0
  %1568 = vmatpush2.bf16.msra.mxu0 0
  %1569 = vmatprep.subr.bf16.mxu0 0
  %1570 = vmatpush2.bf16.msra.mxu0 0
  %1571 = vmatprep.mubr.bf16.mxu0 0
  %1572 = vmatmul.mubr.bf16.gmra.mxu0 %v1452
  %v1573 = vpop.f32.mrf.mxu0
  %v1574 = vadd.f32 %v1489, %v1573
  %v1575 = vpop.f32.mrf.mxu0
  %v1576 = vpop.f32.mrf.mxu0
  %v1577 = vadd.f32 %v1489, %v1576
  %v1578 = vpop.f32.mrf.mxu0
  %1579 = vmatprep.mubr.bf16.mxu0 0
  %1580 = vmatmul.mubr.bf16.gmra.mxu0 %v1453
  %v1581 = vpop.f32.mrf.mxu0
  %v1582 = vadd.f32 %v1489, %v1581
  %v1583 = vpop.f32.mrf.mxu0
  %v1584 = vpop.f32.mrf.mxu0
  %v1585 = vadd.f32 %v1489, %v1584
  %v1586 = vpop.f32.mrf.mxu0
  %1587 = vmatprep.mubr.bf16.mxu0 0
  %1588 = vmatmul.mubr.bf16.gmra.mxu0 %v1454
  %v1589 = vpop.f32.mrf.mxu0
  %v1590 = vadd.f32 %v1489, %v1589
  %v1591 = vpop.f32.mrf.mxu0
  %v1592 = vpop.f32.mrf.mxu0
  %v1593 = vadd.f32 %v1489, %v1592
  %v1594 = vpop.f32.mrf.mxu0
  %1595 = vmatprep.mubr.bf16.mxu0 0
  %1596 = vmatmul.mubr.bf16.gmra.mxu0 %v1455
  %v1597 = vpop.f32.mrf.mxu0
  %v1598 = vadd.f32 %v1489, %v1597
  %v1599 = vpop.f32.mrf.mxu0
  %v1600 = vpop.f32.mrf.mxu0
  %v1601 = vadd.f32 %v1489, %v1600
  %v1602 = vpop.f32.mrf.mxu0
  %1603 = vmatprep.mubr.bf16.mxu0 0
  %1604 = vmatmul.mubr.bf16.gmra.mxu0 %v1456
  %v1605 = vpop.f32.mrf.mxu0
  %v1606 = vadd.f32 %v1489, %v1605
  %v1607 = vpop.f32.mrf.mxu0
  %v1608 = vpop.f32.mrf.mxu0
  %v1609 = vadd.f32 %v1489, %v1608
  %v1610 = vpop.f32.mrf.mxu0
  %1611 = vmatprep.mubr.bf16.mxu0 0
  %1612 = vmatmul.mubr.bf16.gmra.mxu0 %v1457
  %v1613 = vpop.f32.mrf.mxu0
  %v1614 = vadd.f32 %v1489, %v1613
  %v1615 = vpop.f32.mrf.mxu0
  %v1616 = vpop.f32.mrf.mxu0
  %v1617 = vadd.f32 %v1489, %v1616
  %v1618 = vpop.f32.mrf.mxu0
  %1619 = vmatprep.mubr.bf16.mxu0 0
  %1620 = vmatmul.mubr.bf16.gmra.mxu0 %v1458
  %v1621 = vpop.f32.mrf.mxu0
  %v1622 = vadd.f32 %v1489, %v1621
  %v1623 = vpop.f32.mrf.mxu0
  %v1624 = vpop.f32.mrf.mxu0
  %v1625 = vadd.f32 %v1489, %v1624
  %v1626 = vpop.f32.mrf.mxu0
  %1627 = vmatprep.mubr.bf16.mxu0 0
  %1628 = vmatmul.mubr.bf16.gmra.mxu0 %v1459
  %v1629 = vpop.f32.mrf.mxu0
  %v1630 = vadd.f32 %v1489, %v1629
  %v1631 = vpop.f32.mrf.mxu0
  %v1632 = vpop.f32.mrf.mxu0
  %v1633 = vadd.f32 %v1489, %v1632
  %v1634 = vpop.f32.mrf.mxu0
  %1635 = vmatprep.mubr.bf16.mxu0 0
  %1636 = vmatmul.mubr.bf16.gmra.mxu0 %v1460
  %v1637 = vpop.f32.mrf.mxu0
  %v1638 = vadd.f32 %v1489, %v1637
  %v1639 = vpop.f32.mrf.mxu0
  %v1640 = vpop.f32.mrf.mxu0
  %v1641 = vadd.f32 %v1489, %v1640
  %v1642 = vpop.f32.mrf.mxu0
  %1643 = vmatprep.mubr.bf16.mxu0 0
  %1644 = vmatmul.mubr.bf16.gmra.mxu0 %v1461
  %v1645 = vpop.f32.mrf.mxu0
  %v1646 = vadd.f32 %v1489, %v1645
  %v1647 = vpop.f32.mrf.mxu0
  %v1648 = vpop.f32.mrf.mxu0
  %v1649 = vadd.f32 %v1489, %v1648
  %v1650 = vpop.f32.mrf.mxu0
  %1651 = vmatprep.mubr.bf16.mxu0 0
  %1652 = vmatmul.mubr.bf16.gmra.mxu0 %v1462
  %v1653 = vpop.f32.mrf.mxu0
  %v1654 = vadd.f32 %v1489, %v1653
  %v1655 = vpop.f32.mrf.mxu0
  %v1656 = vpop.f32.mrf.mxu0
  %v1657 = vadd.f32 %v1489, %v1656
  %v1658 = vpop.f32.mrf.mxu0
  %1659 = vmatprep.mubr.bf16.mxu0 0
  %1660 = vmatmul.mubr.bf16.gmra.mxu0 %v1463
  %v1661 = vpop.f32.mrf.mxu0
  %v1662 = vadd.f32 %v1489, %v1661
  %v1663 = vpop.f32.mrf.mxu0
  %v1664 = vpop.f32.mrf.mxu0
  %v1665 = vadd.f32 %v1489, %v1664
  %v1666 = vpop.f32.mrf.mxu0
  %1667 = vmatprep.mubr.bf16.mxu0 0
  %1668 = vmatmul.mubr.bf16.gmra.mxu0 %v1464
  %v1669 = vpop.f32.mrf.mxu0
  %v1670 = vadd.f32 %v1489, %v1669
  %v1671 = vpop.f32.mrf.mxu0
  %v1672 = vpop.f32.mrf.mxu0
  %v1673 = vadd.f32 %v1489, %v1672
  %v1674 = vpop.f32.mrf.mxu0
  %1675 = vmatprep.mubr.bf16.mxu0 0
  %1676 = vmatmul.mubr.bf16.gmra.mxu0 %v1465
  %v1677 = vpop.f32.mrf.mxu0
  %v1678 = vadd.f32 %v1489, %v1677
  %v1679 = vpop.f32.mrf.mxu0
  %v1680 = vpop.f32.mrf.mxu0
  %v1681 = vadd.f32 %v1489, %v1680
  %v1682 = vpop.f32.mrf.mxu0
  %1683 = vmatprep.mubr.bf16.mxu0 0
  %1684 = vmatmul.mubr.bf16.gmra.mxu0 %v1466
  %v1685 = vpop.f32.mrf.mxu0
  %v1686 = vadd.f32 %v1489, %v1685
  %v1687 = vpop.f32.mrf.mxu0
  %v1688 = vpop.f32.mrf.mxu0
  %v1689 = vadd.f32 %v1489, %v1688
  %v1690 = vpop.f32.mrf.mxu0
  %1691 = vmatprep.mubr.bf16.mxu0 0
  %1692 = vmatmul.mubr.bf16.gmra.mxu0 %v1467
  %v1693 = vpop.f32.mrf.mxu0
  %v1694 = vadd.f32 %v1489, %v1693
  %v1695 = vpop.f32.mrf.mxu0
  %v1696 = vpop.f32.mrf.mxu0
  %v1697 = vadd.f32 %v1489, %v1696
  %v1698 = vpop.f32.mrf.mxu0
  %1699 = vdwg.mxu0
  %v1700 = vpack.c.bf16 %v1577, %v1574
  %v1701 = vpack.c.bf16 %v1585, %v1582
  %v1702 = vpack.c.bf16 %v1593, %v1590
  %v1703 = vpack.c.bf16 %v1601, %v1598
  %v1704 = vpack.c.bf16 %v1609, %v1606
  %v1705 = vpack.c.bf16 %v1617, %v1614
  %v1706 = vpack.c.bf16 %v1625, %v1622
  %v1707 = vpack.c.bf16 %v1633, %v1630
  %v1708 = vpack.c.bf16 %v1641, %v1638
  %v1709 = vpack.c.bf16 %v1649, %v1646
  %v1710 = vpack.c.bf16 %v1657, %v1654
  %v1711 = vpack.c.bf16 %v1665, %v1662
  %v1712 = vpack.c.bf16 %v1673, %v1670
  %v1713 = vpack.c.bf16 %v1681, %v1678
  %v1714 = vpack.c.bf16 %v1689, %v1686
  %v1715 = vpack.c.bf16 %v1697, %v1694
  %v1716 = vld [vmem:[%s5] sm:$0x1]
  %v1718 = vlaneseq
  %v1719 = vshrl.u32 %v1718, 7
  %v1720 = vsub.s32 0, %v1719
  %v1721 = vrot.slane %v1716, %v1720
  %1723 = vmatprep.subr.bf16.mxu0 0
  %1724 = vmatpush1.bf16.msra.mxu0 %v1707
  %1725 = vmatprep.subr.bf16.mxu0 0
  %1726 = vmatpush1.bf16.msra.mxu0 %v1706
  %1727 = vmatprep.subr.bf16.mxu0 0
  %1728 = vmatpush1.bf16.msra.mxu0 %v1705
  %1729 = vmatprep.subr.bf16.mxu0 0
  %1730 = vmatpush1.bf16.msra.mxu0 %v1704
  %1731 = vmatprep.subr.bf16.mxu0 0
  %1732 = vmatpush1.bf16.msra.mxu0 %v1703
  %1733 = vmatprep.subr.bf16.mxu0 0
  %1734 = vmatpush1.bf16.msra.mxu0 %v1702
  %1735 = vmatprep.subr.bf16.mxu0 0
  %1736 = vmatpush1.bf16.msra.mxu0 %v1701
  %1737 = vmatprep.subr.bf16.mxu0 0
  %1738 = vmatpush1.bf16.msra.mxu0 %v1700
  %1739 = vmatprep.subr.bf16.mxu0 0
  %1740 = vmatpush2.bf16.msra.mxu0 %v1715
  %1741 = vmatprep.subr.bf16.mxu0 0
  %1742 = vmatpush2.bf16.msra.mxu0 %v1714
  %1743 = vmatprep.subr.bf16.mxu0 0
  %1744 = vmatpush2.bf16.msra.mxu0 %v1713
  %1745 = vmatprep.subr.bf16.mxu0 0
  %1746 = vmatpush2.bf16.msra.mxu0 %v1712
  %1747 = vmatprep.subr.bf16.mxu0 0
  %1748 = vmatpush2.bf16.msra.mxu0 %v1711
  %1749 = vmatprep.subr.bf16.mxu0 0
  %1750 = vmatpush2.bf16.msra.mxu0 %v1710
  %1751 = vmatprep.subr.bf16.mxu0 0
  %1752 = vmatpush2.bf16.msra.mxu0 %v1709
  %1753 = vmatprep.subr.bf16.mxu0 0
  %1754 = vmatpush2.bf16.msra.mxu0 %v1708
  %1755 = vmatprep.mubr.bf16.mxu0 %v89
  %1756 = vmatmul.mubr.bf16.gmra.mxu0 %v88
  %v1757 = vpop.f32.mrf.mxu0
  %v1758 = vadd.f32 %v1721, %v1757
  %v1759 = vpop.f32.mrf.mxu0
  %v1760 = vpop.f32.mrf.mxu0
  %v1761 = vadd.f32 %v1721, %v1760
  %v1762 = vpop.f32.mrf.mxu0
  %1763 = vmatprep.mubr.bf16.mxu0 %v91
  %1764 = vmatmul.mubr.bf16.gmra.mxu0 %v90
  %v1765 = vpop.f32.mrf.mxu0
  %v1766 = vadd.f32 %v1721, %v1765
  %v1767 = vpop.f32.mrf.mxu0
  %v1768 = vpop.f32.mrf.mxu0
  %v1769 = vadd.f32 %v1721, %v1768
  %v1770 = vpop.f32.mrf.mxu0
  %1771 = vmatprep.mubr.bf16.mxu0 %v93
  %1772 = vmatmul.mubr.bf16.gmra.mxu0 %v92
  %v1773 = vpop.f32.mrf.mxu0
  %v1774 = vadd.f32 %v1721, %v1773
  %v1775 = vpop.f32.mrf.mxu0
  %v1776 = vpop.f32.mrf.mxu0
  %v1777 = vadd.f32 %v1721, %v1776
  %v1778 = vpop.f32.mrf.mxu0
  %1779 = vmatprep.mubr.bf16.mxu0 %v95
  %1780 = vmatmul.mubr.bf16.gmra.mxu0 %v94
  %v1781 = vpop.f32.mrf.mxu0
  %v1782 = vadd.f32 %v1721, %v1781
  %v1783 = vpop.f32.mrf.mxu0
  %v1784 = vpop.f32.mrf.mxu0
  %v1785 = vadd.f32 %v1721, %v1784
  %v1786 = vpop.f32.mrf.mxu0
  %1787 = vmatprep.mubr.bf16.mxu0 %v97
  %1788 = vmatmul.mubr.bf16.gmra.mxu0 %v96
  %v1789 = vpop.f32.mrf.mxu0
  %v1790 = vadd.f32 %v1721, %v1789
  %v1791 = vpop.f32.mrf.mxu0
  %v1792 = vpop.f32.mrf.mxu0
  %v1793 = vadd.f32 %v1721, %v1792
  %v1794 = vpop.f32.mrf.mxu0
  %1795 = vmatprep.mubr.bf16.mxu0 %v99
  %1796 = vmatmul.mubr.bf16.gmra.mxu0 %v98
  %v1797 = vpop.f32.mrf.mxu0
  %v1798 = vadd.f32 %v1721, %v1797
  %v1799 = vpop.f32.mrf.mxu0
  %v1800 = vpop.f32.mrf.mxu0
  %v1801 = vadd.f32 %v1721, %v1800
  %v1802 = vpop.f32.mrf.mxu0
  %1803 = vmatprep.mubr.bf16.mxu0 %v101
  %1804 = vmatmul.mubr.bf16.gmra.mxu0 %v100
  %v1805 = vpop.f32.mrf.mxu0
  %v1806 = vadd.f32 %v1721, %v1805
  %v1807 = vpop.f32.mrf.mxu0
  %v1808 = vpop.f32.mrf.mxu0
  %v1809 = vadd.f32 %v1721, %v1808
  %v1810 = vpop.f32.mrf.mxu0
  %1811 = vmatprep.mubr.bf16.mxu0 %v103
  %1812 = vmatmul.mubr.bf16.gmra.mxu0 %v102
  %v1813 = vpop.f32.mrf.mxu0
  %v1814 = vadd.f32 %v1721, %v1813
  %v1815 = vpop.f32.mrf.mxu0
  %v1816 = vpop.f32.mrf.mxu0
  %v1817 = vadd.f32 %v1721, %v1816
  %v1818 = vpop.f32.mrf.mxu0
  %1819 = vmatprep.mubr.bf16.mxu0 %v105
  %1820 = vmatmul.mubr.bf16.gmra.mxu0 %v104
  %v1821 = vpop.f32.mrf.mxu0
  %v1822 = vadd.f32 %v1721, %v1821
  %v1823 = vpop.f32.mrf.mxu0
  %v1824 = vpop.f32.mrf.mxu0
  %v1825 = vadd.f32 %v1721, %v1824
  %v1826 = vpop.f32.mrf.mxu0
  %1827 = vmatprep.mubr.bf16.mxu0 %v107
  %1828 = vmatmul.mubr.bf16.gmra.mxu0 %v106
  %v1829 = vpop.f32.mrf.mxu0
  %v1830 = vadd.f32 %v1721, %v1829
  %v1831 = vpop.f32.mrf.mxu0
  %v1832 = vpop.f32.mrf.mxu0
  %v1833 = vadd.f32 %v1721, %v1832
  %v1834 = vpop.f32.mrf.mxu0
  %1835 = vmatprep.mubr.bf16.mxu0 %v109
  %1836 = vmatmul.mubr.bf16.gmra.mxu0 %v108
  %v1837 = vpop.f32.mrf.mxu0
  %v1838 = vadd.f32 %v1721, %v1837
  %v1839 = vpop.f32.mrf.mxu0
  %v1840 = vpop.f32.mrf.mxu0
  %v1841 = vadd.f32 %v1721, %v1840
  %v1842 = vpop.f32.mrf.mxu0
  %1843 = vmatprep.mubr.bf16.mxu0 %v111
  %1844 = vmatmul.mubr.bf16.gmra.mxu0 %v110
  %v1845 = vpop.f32.mrf.mxu0
  %v1846 = vadd.f32 %v1721, %v1845
  %v1847 = vpop.f32.mrf.mxu0
  %v1848 = vpop.f32.mrf.mxu0
  %v1849 = vadd.f32 %v1721, %v1848
  %v1850 = vpop.f32.mrf.mxu0
  %1851 = vmatprep.mubr.bf16.mxu0 %v113
  %1852 = vmatmul.mubr.bf16.gmra.mxu0 %v112
  %v1853 = vpop.f32.mrf.mxu0
  %v1854 = vadd.f32 %v1721, %v1853
  %v1855 = vpop.f32.mrf.mxu0
  %v1856 = vpop.f32.mrf.mxu0
  %v1857 = vadd.f32 %v1721, %v1856
  %v1858 = vpop.f32.mrf.mxu0
  %1859 = vmatprep.mubr.bf16.mxu0 %v115
  %1860 = vmatmul.mubr.bf16.gmra.mxu0 %v114
  %v1861 = vpop.f32.mrf.mxu0
  %v1862 = vadd.f32 %v1721, %v1861
  %v1863 = vpop.f32.mrf.mxu0
  %v1864 = vpop.f32.mrf.mxu0
  %v1865 = vadd.f32 %v1721, %v1864
  %v1866 = vpop.f32.mrf.mxu0
  %1867 = vmatprep.mubr.bf16.mxu0 %v117
  %1868 = vmatmul.mubr.bf16.gmra.mxu0 %v116
  %v1869 = vpop.f32.mrf.mxu0
  %v1870 = vadd.f32 %v1721, %v1869
  %v1871 = vpop.f32.mrf.mxu0
  %v1872 = vpop.f32.mrf.mxu0
  %v1873 = vadd.f32 %v1721, %v1872
  %v1874 = vpop.f32.mrf.mxu0
  %1875 = vmatprep.mubr.bf16.mxu0 %v119
  %1876 = vmatmul.mubr.bf16.gmra.mxu0 %v118
  %v1877 = vpop.f32.mrf.mxu0
  %v1878 = vadd.f32 %v1721, %v1877
  %v1879 = vpop.f32.mrf.mxu0
  %v1880 = vpop.f32.mrf.mxu0
  %v1881 = vadd.f32 %v1721, %v1880
  %v1882 = vpop.f32.mrf.mxu0
  %1883 = vdwg.mxu0
  %1884 = vst [vmem:[%s6] sm:$0xff] %v1758
  %1885 = vst [vmem:[%s6 + $0x8] sm:$0xff] %v1761
  %1886 = vst [vmem:[%s6 + $0x10] sm:$0xff] %v1766
  %1887 = vst [vmem:[%s6 + $0x18] sm:$0xff] %v1769
  %1888 = vst [vmem:[%s6 + $0x20] sm:$0xff] %v1774
  %1889 = vst [vmem:[%s6 + $0x28] sm:$0xff] %v1777
  %1890 = vst [vmem:[%s6 + $0x30] sm:$0xff] %v1782
  %1891 = vst [vmem:[%s6 + $0x38] sm:$0xff] %v1785
  %1892 = vst [vmem:[%s6 + $0x40] sm:$0xff] %v1790
  %1893 = vst [vmem:[%s6 + $0x48] sm:$0xff] %v1793
  %1894 = vst [vmem:[%s6 + $0x50] sm:$0xff] %v1798
  %1895 = vst [vmem:[%s6 + $0x58] sm:$0xff] %v1801
  %1896 = vst [vmem:[%s6 + $0x60] sm:$0xff] %v1806
  %1897 = vst [vmem:[%s6 + $0x68] sm:$0xff] %v1809
  %1898 = vst [vmem:[%s6 + $0x70] sm:$0xff] %v1814
  %1899 = vst [vmem:[%s6 + $0x78] sm:$0xff] %v1817
  %1900 = vst [vmem:[%s6 + $0x80] sm:$0xff] %v1822
  %1901 = vst [vmem:[%s6 + $0x88] sm:$0xff] %v1825
  %1902 = vst [vmem:[%s6 + $0x90] sm:$0xff] %v1830
  %1903 = vst [vmem:[%s6 + $0x98] sm:$0xff] %v1833
  %1904 = vst [vmem:[%s6 + $0xa0] sm:$0xff] %v1838
  %1905 = vst [vmem:[%s6 + $0xa8] sm:$0xff] %v1841
  %1906 = vst [vmem:[%s6 + $0xb0] sm:$0xff] %v1846
  %1907 = vst [vmem:[%s6 + $0xb8] sm:$0xff] %v1849
  %1908 = vst [vmem:[%s6 + $0xc0] sm:$0xff] %v1854
  %1909 = vst [vmem:[%s6 + $0xc8] sm:$0xff] %v1857
  %1910 = vst [vmem:[%s6 + $0xd0] sm:$0xff] %v1862
  %1911 = vst [vmem:[%s6 + $0xd8] sm:$0xff] %v1865
  %1912 = vst [vmem:[%s6 + $0xe0] sm:$0xff] %v1870
  %1913 = vst [vmem:[%s6 + $0xe8] sm:$0xff] %v1873
  %1914 = vst [vmem:[%s6 + $0xf0] sm:$0xff] %v1878
  %1915 = vst [vmem:[%s6 + $0xf8] sm:$0xff] %v1881
  // Predicated region
  $region26: #{gcn_forward.1} parent=0 // pred_check
    _
  $region27: #{gcn_forward.1} parent=0 // pred_check_branch
    %1917 = sbr.rel (0) target = $region29
  $region28: #{gcn_forward.1} parent=0 // pred_region
    _
  $region29: #{gcn_forward.1} parent=0 // pred_fallthru
    _
  // Predicated region
  $region30: #{gcn_forward.1} parent=0 // pred_check
    _
  $region31: #{gcn_forward.1} parent=0 // pred_check_branch
    %1919 = sbr.rel (0) target = $region33
  $region32: #{gcn_forward.1} parent=0 // pred_region
    _
  $region33: #{gcn_forward.1} parent=0 // pred_fallthru
    _

</llo_original>
